<compile_context>
chip_gen: v7x
topology: tpu7x:2x2x1
jax: 0.10.0
libtpu: 0.0.40
codegen_flags: <defaults>
</compile_context>

<pallas_src>
import functools

import jax
import jax.numpy as jnp
from jax import lax
from jax.experimental import pallas as pl
from jax.experimental.pallas import tpu as pltpu

LR = 0.05          # GPStream(lr=0.05)
N_STEPS = 10       # GPStream(n_steps=10)
CHUNK_SIZE = 1     # GPStream(chunk_size=1)

_SQDIST_VPU_MAX_DX = 8   # at/below this the dx-contracted matmul is ~all MXU padding -> use VPU


@functools.lru_cache(maxsize=None)
def _vmem_cfg():
    """Generation-aware (scoped VMEM limit, per-grid-step live-set budget) in bytes."""
    cap = 64 * 1024 * 1024                      # conservative default (v7x: 64 MiB per TC)
    try:
        cap = int(pltpu.get_tpu_info().vmem_capacity_bytes)
    except Exception:                           # non-TPU trace / older runtime
        pass
    limit = min(cap // 2, 96 * 1024 * 1024)     # 64 MiB on v5e/v6e (128 MiB parts), 32 MiB on v7x
    budget = min(cap // 6, 32 * 1024 * 1024)    # ~21 MiB on v5e/v6e, ~10 MiB on v7x
    return limit, budget


# --------------------------------------------------------------------------------------
# Plain-JAX glue: deterministic "streaming" hyperparameter fit (mirrors _stream_through_gp)
# --------------------------------------------------------------------------------------
# TODO(synk): gpytorch's Adam / autograd hyperparameter loop has no Pallas equivalent; it is
# reproduced in plain JAX (streaming chunks, persistent Adam state), vmapped over the batch.
def _softplus(x):
    return jnp.logaddexp(x, 0.0)


def _sqdist_host(a, b):
    an = jnp.sum(a * a, axis=-1, keepdims=True)
    bn = jnp.sum(b * b, axis=-1, keepdims=True)
    return jnp.maximum(an + bn.T - 2.0 * (a @ b.T), 0.0)


def _chunk_nll_general(params, x, y):
    # params = [raw_lengthscale, raw_outputscale, raw_noise, mean_const]
    # gpytorch defaults: Positive()=softplus, GaussianLikelihood noise > 1e-4.
    ls = _softplus(params[0])
    osc = _softplus(params[1])
    noise = _softplus(params[2]) + 1e-4
    mc = params[3]
    c = x.shape[0]
    K = osc * jnp.exp(-0.5 * _sqdist_host(x, x) / (ls * ls)) + noise * jnp.eye(c, dtype=x.dtype)
    r = y - mc
    L = jnp.linalg.cholesky(K)
    alpha = jax.scipy.linalg.cho_solve((L, True), r)
    logdet = 2.0 * jnp.sum(jnp.log(jnp.diag(L)))
    logprob = -0.5 * jnp.dot(r, alpha) - 0.5 * logdet - 0.5 * c * jnp.log(2.0 * jnp.pi)
    return -logprob / c   # ExactMarginalLogLikelihood divides by num_data


def _chunk_nll_scalar(params, x, y):
    # chunk_size == 1: K is the scalar osc*exp(0) + noise; closed form, no cholesky/solve.
    osc = _softplus(params[1])
    noise = _softplus(params[2]) + 1e-4
    mc = params[3]
    k = osc + noise
    r = y[0] - mc
    return 0.5 * (r * r / k + jnp.log(k) + jnp.log(2.0 * jnp.pi))


def _train_one(xc_i, yc_i):
    nc, dx = xc_i.shape
    xs = xc_i.reshape(nc // CHUNK_SIZE, CHUNK_SIZE, dx)
    ys = yc_i.reshape(nc // CHUNK_SIZE, CHUNK_SIZE)
    nll = _chunk_nll_scalar if CHUNK_SIZE == 1 else _chunk_nll_general
    grad_fn = jax.grad(nll)

    def chunk_step(carry, chunk):
        x, y = chunk

        def adam_step(c2, _):
            params, m_s, v_s, t = c2
            g = grad_fn(params, x, y)
            t = t + 1.0
            m_s = 0.9 * m_s + 0.1 * g
            v_s = 0.999 * v_s + 0.001 * g * g
            m_hat = m_s / (1.0 - jnp.power(0.9, t))
            v_hat = v_s / (1.0 - jnp.power(0.999, t))
            params = params - LR * m_hat / (jnp.sqrt(v_hat) + 1e-8)
            return (params, m_s, v_s, t), 0.0

        carry, _ = lax.scan(adam_step, carry, None, length=N_STEPS)
        return carry, 0.0

    init = (jnp.zeros((4,), jnp.float32),   # raw params (ls, outputscale, noise, mean)
            jnp.zeros((4,), jnp.float32),   # Adam m
            jnp.zeros((4,), jnp.float32),   # Adam v
            jnp.float32(0.0))               # Adam step count
    (params, _, _, _), _ = lax.scan(chunk_step, init, (xs, ys))
    ls = _softplus(params[0])
    osc = _softplus(params[1])
    noise = _softplus(params[2]) + 1e-4
    mc = params[3]
    return jnp.stack([ls, osc, noise, mc])   # constrained hypers, shape (4,)


# --------------------------------------------------------------------------------------
# Pallas kernels: batched RBF gram matrices + exact-GP predictive mean / covariance
# --------------------------------------------------------------------------------------
def _pad2(r, c):
    # f32 element count of an (r, c) tile after (8, 128) vreg padding.
    return ((r + 7) // 8) * 8 * ((c + 127) // 128) * 128


def _sqdist_b(a, bt):
    """Batched squared distances. a: (B, na, d); bt: (B, d, nb) pre-transposed -> (B, na, nb)."""
    d = a.shape[2]
    if d <= _SQDIST_VPU_MAX_DX:
        # Small-dx path: unrolled per-feature VPU accumulation (no MXU push/pop, no reductions).
        acc = None
        for k in range(d):
            diff = a[:, :, k:k + 1] - bt[:, k:k + 1, :]      # (B, na, nb) via sublane/lane broadcast
            sq = diff * diff
            acc = sq if acc is None else acc + sq
        return acc
    # Larger dx: MXU inner product; row/col norms broadcast on the VPU (no `ones` matmul).
    inner = lax.dot_general(a, bt, (((2,), (1,)), ((0,), (0,))),
                            preferred_element_type=jnp.float32)
    an = jnp.sum(a * a, axis=-1, keepdims=True)              # (B, na, 1)
    bn = jnp.sum(bt * bt, axis=1, keepdims=True)             # (B, 1, nb)
    return jnp.maximum(an + bn - 2.0 * inner, 0.0)


def _rbf_b(a, bt, osc, neg_half_inv_ls2):
    # osc, neg_half_inv_ls2: (B, 1, 1) per-element hypers.
    return osc * jnp.exp(_sqdist_b(a, bt) * neg_half_inv_ls2)


def _add_noise_diag(k, noise):
    # k: (B, n, n), noise: (B, 1, 1). Diagonal select; no materialized f32 identity / full multiply.
    n = k.shape[-1]
    ri = lax.broadcasted_iota(jnp.int32, (n, n), 0)
    ci = lax.broadcasted_iota(jnp.int32, (n, n), 1)
    diag = (ri == ci)[None, :, :]
    return jnp.where(diag, k + noise, k)


def _kcc_kernel(hyp_ref, xc_ref, xct_ref, kcc_ref):
    hyp = hyp_ref[...]                           # (B, 1, 4): [ls, outputscale, noise, mean]
    ls = hyp[:, :, 0:1]
    osc = hyp[:, :, 1:2]
    noise = hyp[:, :, 2:3]
    scale = -0.5 / (ls * ls)
    kcc_ref[...] = _add_noise_diag(_rbf_b(xc_ref[...], xct_ref[...], osc, scale), noise)


def _predict_kernel(hyp_ref, xt_ref, xtt_ref, xct_ref, kinv_ref, yc_ref, mean_ref, cov_ref):
    hyp = hyp_ref[...]                           # (B, 1, 4)
    ls = hyp[:, :, 0:1]
    osc = hyp[:, :, 1:2]
    noise = hyp[:, :, 2:3]
    mc = hyp[:, :, 3:4]
    scale = -0.5 / (ls * ls)
    xt = xt_ref[...]                             # (B, nt, dx)
    ktc = _rbf_b(xt, xct_ref[...], osc, scale)   # (B, nt, nc)
    tmp = lax.dot_general(ktc, kinv_ref[...], (((2,), (1,)), ((0,), (0,))),
                          preferred_element_type=jnp.float32)               # K_tc Kcc^-1 (B, nt, nc)
    resid = yc_ref[...] - mc                     # (B, 1, nc), lane-dense
    mean_ref[...] = mc + lax.dot_general(resid, tmp, (((2,), (2,)), ((0,), (0,))),
                                         preferred_element_type=jnp.float32)    # (B, 1, nt)
    cross = lax.dot_general(tmp, ktc, (((2,), (2,)), ((0,), (0,))),
                            preferred_element_type=jnp.float32)              # K_tc Kcc^-1 K_ct
    ktt = _add_noise_diag(_rbf_b(xt, xtt_ref[...], osc, scale), noise)       # K_tt + noise*I
    # likelihood(f_dist): observation noise included; single store, no cov read-modify-write.
    cov_ref[...] = ktt - cross


def _largest_divisor_leq(m, cap):
    cap = max(1, min(m, cap))
    for b in range(cap, 0, -1):
        if m % b == 0:
            return b
    return 1


def _pick_block_b(m, per_elem_bytes):
    _, budget = _vmem_cfg()
    cap = max(1, budget // max(int(per_elem_bytes), 1))
    if m >= 2:
        cap = min(cap, m // 2)   # keep >= 2 grid steps so "parallel" can shard across v7x's 2 TCs
    return _largest_divisor_leq(m, cap)


def compute_kcc(hyp3, xc, xct):
    m, nc, dx = xc.shape
    # Per-element live bytes: 2x-double-buffered pipelined blocks + in-kernel temporaries,
    # counted at (8,128)-padded tile sizes.
    per_elem = 4 * (2 * (_pad2(1, 4) + _pad2(nc, dx) + _pad2(dx, nc))   # inputs (x2 buffers)
                    + 2 * _pad2(nc, nc)                                  # output (x2 buffers)
                    + 3 * _pad2(nc, nc))                                 # sqdist/exp temporaries
    B = _pick_block_b(m, per_elem)
    vmem_limit, _ = _vmem_cfg()
    return pl.pallas_call(
        _kcc_kernel,
        out_shape=jax.ShapeDtypeStruct((m, nc, nc), jnp.float32),
        grid=(m // B,),
        in_specs=[pl.BlockSpec((B, 1, 4), lambda i: (i, 0, 0)),
                  pl.BlockSpec((B, nc, dx), lambda i: (i, 0, 0)),
                  pl.BlockSpec((B, dx, nc), lambda i: (i, 0, 0))],
        out_specs=pl.BlockSpec((B, nc, nc), lambda i: (i, 0, 0)),
        compiler_params=pltpu.CompilerParams(
            dimension_semantics=("parallel",),
            vmem_limit_bytes=vmem_limit),
    )(hyp3, xc, xct)


def gp_predict(hyp3, xt, xtt, xct, kcc_inv, yc_row):
    m, nt, dx = xt.shape
    nc = xct.shape[2]
    # TODO(synk): very large nt (>= ~1024) would need an additional nt-tiled grid axis here to
    # stay inside VMEM; blocks are currently whole (nt, nt) per batch element.
    per_elem = 4 * (2 * (_pad2(1, 4) + _pad2(nt, dx) + _pad2(dx, nt) + _pad2(dx, nc)
                         + _pad2(nc, nc) + _pad2(1, nc))              # inputs (x2 buffers)
                    + 2 * (_pad2(1, nt) + _pad2(nt, nt))              # outputs (x2 buffers)
                    + 3 * _pad2(nt, nt) + 3 * _pad2(nt, nc))          # ktc/tmp/cross/ktt temporaries
    B = _pick_block_b(m, per_elem)
    vmem_limit, _ = _vmem_cfg()
    return pl.pallas_call(
        _predict_kernel,
        out_shape=(jax.ShapeDtypeStruct((m, 1, nt), jnp.float32),
                   jax.ShapeDtypeStruct((m, nt, nt), jnp.float32)),
        grid=(m // B,),
        in_specs=[pl.BlockSpec((B, 1, 4), lambda i: (i, 0, 0)),
                  pl.BlockSpec((B, nt, dx), lambda i: (i, 0, 0)),
                  pl.BlockSpec((B, dx, nt), lambda i: (i, 0, 0)),
                  pl.BlockSpec((B, dx, nc), lambda i: (i, 0, 0)),
                  pl.BlockSpec((B, nc, nc), lambda i: (i, 0, 0)),
                  pl.BlockSpec((B, 1, nc), lambda i: (i, 0, 0))],
        out_specs=(pl.BlockSpec((B, 1, nt), lambda i: (i, 0, 0)),
                   pl.BlockSpec((B, nt, nt), lambda i: (i, 0, 0))),
        compiler_params=pltpu.CompilerParams(
            dimension_semantics=("parallel",),
            vmem_limit_bytes=vmem_limit),
    )(hyp3, xt, xtt, xct, kcc_inv, yc_row)


# --------------------------------------------------------------------------------------
# GPStream.forward
# --------------------------------------------------------------------------------------
def gp_stream_forward(xc, yc, xt):
    xc = xc.astype(jnp.float32)
    yc = yc.astype(jnp.float32)
    xt = xt.astype(jnp.float32)
    m, nc, _ = xc.shape
    nt = xt.shape[1]

    # Per-batch-element GP hyperparameters (fresh kernel/likelihood per i, streamed Adam fit).
    hypers = jax.vmap(_train_one)(xc, yc[..., 0])            # (m, 4): [ls, outputscale, noise, mean]
    hyp3 = hypers.reshape(m, 1, 4)

    # Wrapper-side layout plumbing: feature-transposed copies so the kernels build gram matrices
    # without any in-kernel transpose or broadcast matmul.
    xct = jnp.swapaxes(xc, 1, 2)                             # (m, dx, nc)
    xtt = jnp.swapaxes(xt, 1, 2)                             # (m, dx, nt)

    kcc = compute_kcc(hyp3, xc, xct)                         # Pallas: K_cc + noise*I

    # TODO(synk): Cholesky factorization / triangular solve has no clean Pallas TPU equivalent;
    # the small batched (nc x nc) solve stays in plain JAX (cho_solve, better conditioned than inv).
    L = jnp.linalg.cholesky(kcc)
    eye = jnp.eye(nc, dtype=jnp.float32)
    kcc_inv = jax.vmap(lambda Li: jax.scipy.linalg.cho_solve((Li, True), eye))(L)

    yc_row = yc.reshape(m, 1, nc)                            # lane-dense targets; centered in-kernel
    mean_row, cov = gp_predict(hyp3, xt, xtt, xct, kcc_inv, yc_row)  # Pallas: prediction hot path
    mean = mean_row.reshape(m, nt, 1)
    return mean, cov                                         # MultitaskMVN.from_batch equivalent


if __name__ == "__main__":
    m, nc, nt, dx = 2, 8, 8, 2
    key = jax.random.PRNGKey(0)
    k1, k2, k3 = jax.random.split(key, 3)
    xc = jax.random.normal(k1, (m, nc, dx), jnp.float32)
    xt = jax.random.normal(k2, (m, nt, dx), jnp.float32)
    yc = (jnp.sin(xc.sum(-1, keepdims=True))
          + 0.05 * jax.random.normal(k3, (m, nc, 1), jnp.float32))

    fwd = jax.jit(gp_stream_forward)
    mean, cov = fwd(xc, yc, xt)
    jax.block_until_ready((mean, cov))

    assert mean.shape == (m, nt, 1) and cov.shape == (m, nt, nt)
    assert bool(jnp.all(jnp.isfinite(mean))) and bool(jnp.all(jnp.isfinite(cov)))
    print("KERNEL_OK")
</pallas_src>

<mosaic_0001>
module attributes {stable_mosaic.version = 11 : i64} {
  func.func @_kcc_kernel(%arg0: i32, %arg1: memref<1x1x4xf32, #tpu.memory_space<vmem>>, %arg2: memref<1x8x2xf32, #tpu.memory_space<vmem>>, %arg3: memref<1x2x8xf32, #tpu.memory_space<vmem>>, %arg4: memref<1x8x8xf32, #tpu.memory_space<vmem>>) attributes {dimension_semantics = [#tpu.dimension_semantics<parallel>], iteration_bounds = array<i64: 2>, scalar_prefetch = 0 : i64, scratch_operands = 0 : i64, tpu.core_type = #tpu.core_type<tc>, window_params = [{transform_indices = @transform_0, window_bounds = array<i64: 1, 1, 4>}, {transform_indices = @transform_1, window_bounds = array<i64: 1, 8, 2>}, {transform_indices = @transform_2, window_bounds = array<i64: 1, 2, 8>}, {transform_indices = @transform_3, window_bounds = array<i64: 1, 8, 8>}]} {
    %c0 = arith.constant 0 : index
    %c0_0 = arith.constant 0 : index
    %c0_1 = arith.constant 0 : index
    %0 = vector.load %arg1[%c0, %c0_0, %c0_1] : memref<1x1x4xf32, #tpu.memory_space<vmem>>, vector<1x1x4xf32>
    %1 = vector.extract_strided_slice %0 {offsets = [0, 0, 0], sizes = [1, 1, 1], strides = [1, 1, 1]} : vector<1x1x4xf32> to vector<1x1x1xf32>
    %2 = vector.extract_strided_slice %0 {offsets = [0, 0, 1], sizes = [1, 1, 1], strides = [1, 1, 1]} : vector<1x1x4xf32> to vector<1x1x1xf32>
    %3 = vector.extract_strided_slice %0 {offsets = [0, 0, 2], sizes = [1, 1, 1], strides = [1, 1, 1]} : vector<1x1x4xf32> to vector<1x1x1xf32>
    %4 = arith.mulf %1, %1 : vector<1x1x1xf32>
    %cst = arith.constant -5.000000e-01 : f32
    %5 = vector.broadcast %cst : f32 to vector<1x1x1xf32>
    %6 = arith.divf %5, %4 : vector<1x1x1xf32>
    %c0_2 = arith.constant 0 : index
    %c0_3 = arith.constant 0 : index
    %c0_4 = arith.constant 0 : index
    %7 = vector.load %arg2[%c0_2, %c0_3, %c0_4] : memref<1x8x2xf32, #tpu.memory_space<vmem>>, vector<1x8x2xf32>
    %c0_5 = arith.constant 0 : index
    %c0_6 = arith.constant 0 : index
    %c0_7 = arith.constant 0 : index
    %8 = vector.load %arg3[%c0_5, %c0_6, %c0_7] : memref<1x2x8xf32, #tpu.memory_space<vmem>>, vector<1x2x8xf32>
    %9 = vector.extract_strided_slice %7 {offsets = [0, 0, 0], sizes = [1, 8, 1], strides = [1, 1, 1]} : vector<1x8x2xf32> to vector<1x8x1xf32>
    %10 = vector.extract_strided_slice %8 {offsets = [0, 0, 0], sizes = [1, 1, 8], strides = [1, 1, 1]} : vector<1x2x8xf32> to vector<1x1x8xf32>
    %11 = vector.broadcast %9 : vector<1x8x1xf32> to vector<1x8x8xf32>
    %12 = vector.broadcast %10 : vector<1x1x8xf32> to vector<1x8x8xf32>
    %13 = arith.subf %11, %12 : vector<1x8x8xf32>
    %14 = arith.mulf %13, %13 : vector<1x8x8xf32>
    %15 = vector.extract_strided_slice %7 {offsets = [0, 0, 1], sizes = [1, 8, 1], strides = [1, 1, 1]} : vector<1x8x2xf32> to vector<1x8x1xf32>
    %16 = vector.extract_strided_slice %8 {offsets = [0, 1, 0], sizes = [1, 1, 8], strides = [1, 1, 1]} : vector<1x2x8xf32> to vector<1x1x8xf32>
    %17 = vector.broadcast %15 : vector<1x8x1xf32> to vector<1x8x8xf32>
    %18 = vector.broadcast %16 : vector<1x1x8xf32> to vector<1x8x8xf32>
    %19 = arith.subf %17, %18 : vector<1x8x8xf32>
    %20 = arith.mulf %19, %19 : vector<1x8x8xf32>
    %21 = arith.addf %14, %20 : vector<1x8x8xf32>
    %22 = vector.broadcast %6 : vector<1x1x1xf32> to vector<1x8x8xf32>
    %23 = arith.mulf %21, %22 : vector<1x8x8xf32>
    %24 = math.exp %23 : vector<1x8x8xf32>
    %25 = vector.broadcast %2 : vector<1x1x1xf32> to vector<1x8x8xf32>
    %26 = arith.mulf %25, %24 : vector<1x8x8xf32>
    %27 = tpu.iota {dimensions = array<i32: 0>} : vector<8x8xi32>
    %28 = tpu.iota {dimensions = array<i32: 1>} : vector<8x8xi32>
    %29 = arith.cmpi eq, %27, %28 : vector<8x8xi32>
    %30 = vector.shape_cast %29 : vector<8x8xi1> to vector<1x8x8xi1>
    %31 = vector.broadcast %3 : vector<1x1x1xf32> to vector<1x8x8xf32>
    %32 = arith.addf %26, %31 : vector<1x8x8xf32>
    %33 = arith.select %30, %32, %26 : vector<1x8x8xi1>, vector<1x8x8xf32>
    %c0_8 = arith.constant 0 : index
    %c0_9 = arith.constant 0 : index
    %c0_10 = arith.constant 0 : index
    %34 = vector.load %arg4[%c0_8, %c0_9, %c0_10] : memref<1x8x8xf32, #tpu.memory_space<vmem>>, vector<1x8x8xf32>
    tpu.vector_store %arg4[%c0_8, %c0_9, %c0_10], %33 {strides = array<i32>} : memref<1x8x8xf32, #tpu.memory_space<vmem>>, vector<1x8x8xf32>,
    return
  }
  func.func @transform_0(%arg0: i32) -> (i32, i32, i32) {
    %c0_i32 = arith.constant 0 : i32
    %c0_i32_0 = arith.constant 0 : i32
    %c0_i32_1 = arith.constant 0 : i32
    return %arg0, %c0_i32, %c0_i32_0 : i32, i32, i32
  }
  func.func @transform_1(%arg0: i32) -> (i32, i32, i32) {
    %c0_i32 = arith.constant 0 : i32
    %c0_i32_0 = arith.constant 0 : i32
    %c0_i32_1 = arith.constant 0 : i32
    return %arg0, %c0_i32, %c0_i32_0 : i32, i32, i32
  }
  func.func @transform_2(%arg0: i32) -> (i32, i32, i32) {
    %c0_i32 = arith.constant 0 : i32
    %c0_i32_0 = arith.constant 0 : i32
    %c0_i32_1 = arith.constant 0 : i32
    return %arg0, %c0_i32, %c0_i32_0 : i32, i32, i32
  }
  func.func @transform_3(%arg0: i32) -> (i32, i32, i32) {
    %c0_i32 = arith.constant 0 : i32
    %c0_i32_0 = arith.constant 0 : i32
    %c0_i32_1 = arith.constant 0 : i32
    return %arg0, %c0_i32, %c0_i32_0 : i32, i32, i32
  }
}

module attributes {stable_mosaic.version = 11 : i64} {
  func.func @_predict_kernel(%arg0: i32, %arg1: memref<1x1x4xf32, #tpu.memory_space<vmem>>, %arg2: memref<1x8x2xf32, #tpu.memory_space<vmem>>, %arg3: memref<1x2x8xf32, #tpu.memory_space<vmem>>, %arg4: memref<1x2x8xf32, #tpu.memory_space<vmem>>, %arg5: memref<1x8x8xf32, #tpu.memory_space<vmem>>, %arg6: memref<1x1x8xf32, #tpu.memory_space<vmem>>, %arg7: memref<1x1x8xf32, #tpu.memory_space<vmem>>, %arg8: memref<1x8x8xf32, #tpu.memory_space<vmem>>) attributes {dimension_semantics = [#tpu.dimension_semantics<parallel>], iteration_bounds = array<i64: 2>, scalar_prefetch = 0 : i64, scratch_operands = 0 : i64, tpu.core_type = #tpu.core_type<tc>, window_params = [{transform_indices = @transform_0, window_bounds = array<i64: 1, 1, 4>}, {transform_indices = @transform_1, window_bounds = array<i64: 1, 8, 2>}, {transform_indices = @transform_2, window_bounds = array<i64: 1, 2, 8>}, {transform_indices = @transform_3, window_bounds = array<i64: 1, 2, 8>}, {transform_indices = @transform_4, window_bounds = array<i64: 1, 8, 8>}, {transform_indices = @transform_5, window_bounds = array<i64: 1, 1, 8>}, {transform_indices = @transform_6, window_bounds = array<i64: 1, 1, 8>}, {transform_indices = @transform_7, window_bounds = array<i64: 1, 8, 8>}]} {
    %c0 = arith.constant 0 : index
    %c0_0 = arith.constant 0 : index
    %c0_1 = arith.constant 0 : index
    %0 = vector.load %arg1[%c0, %c0_0, %c0_1] : memref<1x1x4xf32, #tpu.memory_space<vmem>>, vector<1x1x4xf32>
    %1 = vector.extract_strided_slice %0 {offsets = [0, 0, 0], sizes = [1, 1, 1], strides = [1, 1, 1]} : vector<1x1x4xf32> to vector<1x1x1xf32>
    %2 = vector.extract_strided_slice %0 {offsets = [0, 0, 1], sizes = [1, 1, 1], strides = [1, 1, 1]} : vector<1x1x4xf32> to vector<1x1x1xf32>
    %3 = vector.extract_strided_slice %0 {offsets = [0, 0, 2], sizes = [1, 1, 1], strides = [1, 1, 1]} : vector<1x1x4xf32> to vector<1x1x1xf32>
    %4 = vector.extract_strided_slice %0 {offsets = [0, 0, 3], sizes = [1, 1, 1], strides = [1, 1, 1]} : vector<1x1x4xf32> to vector<1x1x1xf32>
    %5 = arith.mulf %1, %1 : vector<1x1x1xf32>
    %cst = arith.constant -5.000000e-01 : f32
    %6 = vector.broadcast %cst : f32 to vector<1x1x1xf32>
    %7 = arith.divf %6, %5 : vector<1x1x1xf32>
    %c0_2 = arith.constant 0 : index
    %c0_3 = arith.constant 0 : index
    %c0_4 = arith.constant 0 : index
    %8 = vector.load %arg2[%c0_2, %c0_3, %c0_4] : memref<1x8x2xf32, #tpu.memory_space<vmem>>, vector<1x8x2xf32>
    %c0_5 = arith.constant 0 : index
    %c0_6 = arith.constant 0 : index
    %c0_7 = arith.constant 0 : index
    %9 = vector.load %arg4[%c0_5, %c0_6, %c0_7] : memref<1x2x8xf32, #tpu.memory_space<vmem>>, vector<1x2x8xf32>
    %10 = vector.extract_strided_slice %8 {offsets = [0, 0, 0], sizes = [1, 8, 1], strides = [1, 1, 1]} : vector<1x8x2xf32> to vector<1x8x1xf32>
    %11 = vector.extract_strided_slice %9 {offsets = [0, 0, 0], sizes = [1, 1, 8], strides = [1, 1, 1]} : vector<1x2x8xf32> to vector<1x1x8xf32>
    %12 = vector.broadcast %10 : vector<1x8x1xf32> to vector<1x8x8xf32>
    %13 = vector.broadcast %11 : vector<1x1x8xf32> to vector<1x8x8xf32>
    %14 = arith.subf %12, %13 : vector<1x8x8xf32>
    %15 = arith.mulf %14, %14 : vector<1x8x8xf32>
    %16 = vector.extract_strided_slice %8 {offsets = [0, 0, 1], sizes = [1, 8, 1], strides = [1, 1, 1]} : vector<1x8x2xf32> to vector<1x8x1xf32>
    %17 = vector.extract_strided_slice %9 {offsets = [0, 1, 0], sizes = [1, 1, 8], strides = [1, 1, 1]} : vector<1x2x8xf32> to vector<1x1x8xf32>
    %18 = vector.broadcast %16 : vector<1x8x1xf32> to vector<1x8x8xf32>
    %19 = vector.broadcast %17 : vector<1x1x8xf32> to vector<1x8x8xf32>
    %20 = arith.subf %18, %19 : vector<1x8x8xf32>
    %21 = arith.mulf %20, %20 : vector<1x8x8xf32>
    %22 = arith.addf %15, %21 : vector<1x8x8xf32>
    %23 = vector.broadcast %7 : vector<1x1x1xf32> to vector<1x8x8xf32>
    %24 = arith.mulf %22, %23 : vector<1x8x8xf32>
    %25 = math.exp %24 : vector<1x8x8xf32>
    %26 = vector.broadcast %2 : vector<1x1x1xf32> to vector<1x8x8xf32>
    %27 = arith.mulf %26, %25 : vector<1x8x8xf32>
    %c0_8 = arith.constant 0 : index
    %c0_9 = arith.constant 0 : index
    %c0_10 = arith.constant 0 : index
    %28 = vector.load %arg5[%c0_8, %c0_9, %c0_10] : memref<1x8x8xf32, #tpu.memory_space<vmem>>, vector<1x8x8xf32>
    %cst_11 = arith.constant dense<0.000000e+00> : vector<1x8x8xf32>
    %29 = tpu.matmul %27, %28, %cst_11 {dimension_numbers = #tpu.dot_dimension_numbers<[2], [1], [1], [2], [0, 0, 0, 1, 1, 2], [0], [0]>} : vector<1x8x8xf32>, vector<1x8x8xf32>, vector<1x8x8xf32> -> vector<1x8x8xf32>
    %c0_12 = arith.constant 0 : index
    %c0_13 = arith.constant 0 : index
    %c0_14 = arith.constant 0 : index
    %30 = vector.load %arg6[%c0_12, %c0_13, %c0_14] : memref<1x1x8xf32, #tpu.memory_space<vmem>>, vector<1x1x8xf32>
    %31 = vector.broadcast %4 : vector<1x1x1xf32> to vector<1x1x8xf32>
    %32 = arith.subf %30, %31 : vector<1x1x8xf32>
    %cst_15 = arith.constant dense<0.000000e+00> : vector<1x1x8xf32>
    %33 = tpu.matmul %32, %29, %cst_15 {dimension_numbers = #tpu.dot_dimension_numbers<[2], [2], [1], [1], [0, 0, 0, 1, 1, 1], [0], [0]>} : vector<1x1x8xf32>, vector<1x8x8xf32>, vector<1x1x8xf32> -> vector<1x1x8xf32>
    %34 = vector.broadcast %4 : vector<1x1x1xf32> to vector<1x1x8xf32>
    %35 = arith.addf %34, %33 : vector<1x1x8xf32>
    %c0_16 = arith.constant 0 : index
    %c0_17 = arith.constant 0 : index
    %c0_18 = arith.constant 0 : index
    %36 = vector.load %arg7[%c0_16, %c0_17, %c0_18] : memref<1x1x8xf32, #tpu.memory_space<vmem>>, vector<1x1x8xf32>
    tpu.vector_store %arg7[%c0_16, %c0_17, %c0_18], %35 {strides = array<i32>} : memref<1x1x8xf32, #tpu.memory_space<vmem>>, vector<1x1x8xf32>,
    %cst_19 = arith.constant dense<0.000000e+00> : vector<1x8x8xf32>
    %37 = tpu.matmul %29, %27, %cst_19 {dimension_numbers = #tpu.dot_dimension_numbers<[2], [2], [1], [1], [0, 0, 0, 1, 1, 1], [0], [0]>} : vector<1x8x8xf32>, vector<1x8x8xf32>, vector<1x8x8xf32> -> vector<1x8x8xf32>
    %c0_20 = arith.constant 0 : index
    %c0_21 = arith.constant 0 : index
    %c0_22 = arith.constant 0 : index
    %38 = vector.load %arg3[%c0_20, %c0_21, %c0_22] : memref<1x2x8xf32, #tpu.memory_space<vmem>>, vector<1x2x8xf32>
    %39 = vector.extract_strided_slice %8 {offsets = [0, 0, 0], sizes = [1, 8, 1], strides = [1, 1, 1]} : vector<1x8x2xf32> to vector<1x8x1xf32>
    %40 = vector.extract_strided_slice %38 {offsets = [0, 0, 0], sizes = [1, 1, 8], strides = [1, 1, 1]} : vector<1x2x8xf32> to vector<1x1x8xf32>
    %41 = vector.broadcast %39 : vector<1x8x1xf32> to vector<1x8x8xf32>
    %42 = vector.broadcast %40 : vector<1x1x8xf32> to vector<1x8x8xf32>
    %43 = arith.subf %41, %42 : vector<1x8x8xf32>
    %44 = arith.mulf %43, %43 : vector<1x8x8xf32>
    %45 = vector.extract_strided_slice %8 {offsets = [0, 0, 1], sizes = [1, 8, 1], strides = [1, 1, 1]} : vector<1x8x2xf32> to vector<1x8x1xf32>
    %46 = vector.extract_strided_slice %38 {offsets = [0, 1, 0], sizes = [1, 1, 8], strides = [1, 1, 1]} : vector<1x2x8xf32> to vector<1x1x8xf32>
    %47 = vector.broadcast %45 : vector<1x8x1xf32> to vector<1x8x8xf32>
    %48 = vector.broadcast %46 : vector<1x1x8xf32> to vector<1x8x8xf32>
    %49 = arith.subf %47, %48 : vector<1x8x8xf32>
    %50 = arith.mulf %49, %49 : vector<1x8x8xf32>
    %51 = arith.addf %44, %50 : vector<1x8x8xf32>
    %52 = vector.broadcast %7 : vector<1x1x1xf32> to vector<1x8x8xf32>
    %53 = arith.mulf %51, %52 : vector<1x8x8xf32>
    %54 = math.exp %53 : vector<1x8x8xf32>
    %55 = vector.broadcast %2 : vector<1x1x1xf32> to vector<1x8x8xf32>
    %56 = arith.mulf %55, %54 : vector<1x8x8xf32>
    %57 = tpu.iota {dimensions = array<i32: 0>} : vector<8x8xi32>
    %58 = tpu.iota {dimensions = array<i32: 1>} : vector<8x8xi32>
    %59 = arith.cmpi eq, %57, %58 : vector<8x8xi32>
    %60 = vector.shape_cast %59 : vector<8x8xi1> to vector<1x8x8xi1>
    %61 = vector.broadcast %3 : vector<1x1x1xf32> to vector<1x8x8xf32>
    %62 = arith.addf %56, %61 : vector<1x8x8xf32>
    %63 = arith.select %60, %62, %56 : vector<1x8x8xi1>, vector<1x8x8xf32>
    %64 = arith.subf %63, %37 : vector<1x8x8xf32>
    %c0_23 = arith.constant 0 : index
    %c0_24 = arith.constant 0 : index
    %c0_25 = arith.constant 0 : index
    %65 = vector.load %arg8[%c0_23, %c0_24, %c0_25] : memref<1x8x8xf32, #tpu.memory_space<vmem>>, vector<1x8x8xf32>
    tpu.vector_store %arg8[%c0_23, %c0_24, %c0_25], %64 {strides = array<i32>} : memref<1x8x8xf32, #tpu.memory_space<vmem>>, vector<1x8x8xf32>,
    return
  }
  func.func @transform_0(%arg0: i32) -> (i32, i32, i32) {
    %c0_i32 = arith.constant 0 : i32
    %c0_i32_0 = arith.constant 0 : i32
    %c0_i32_1 = arith.constant 0 : i32
    return %arg0, %c0_i32, %c0_i32_0 : i32, i32, i32
  }
  func.func @transform_1(%arg0: i32) -> (i32, i32, i32) {
    %c0_i32 = arith.constant 0 : i32
    %c0_i32_0 = arith.constant 0 : i32
    %c0_i32_1 = arith.constant 0 : i32
    return %arg0, %c0_i32, %c0_i32_0 : i32, i32, i32
  }
  func.func @transform_2(%arg0: i32) -> (i32, i32, i32) {
    %c0_i32 = arith.constant 0 : i32
    %c0_i32_0 = arith.constant 0 : i32
    %c0_i32_1 = arith.constant 0 : i32
    return %arg0, %c0_i32, %c0_i32_0 : i32, i32, i32
  }
  func.func @transform_3(%arg0: i32) -> (i32, i32, i32) {
    %c0_i32 = arith.constant 0 : i32
    %c0_i32_0 = arith.constant 0 : i32
    %c0_i32_1 = arith.constant 0 : i32
    return %arg0, %c0_i32, %c0_i32_0 : i32, i32, i32
  }
  func.func @transform_4(%arg0: i32) -> (i32, i32, i32) {
    %c0_i32 = arith.constant 0 : i32
    %c0_i32_0 = arith.constant 0 : i32
    %c0_i32_1 = arith.constant 0 : i32
    return %arg0, %c0_i32, %c0_i32_0 : i32, i32, i32
  }
  func.func @transform_5(%arg0: i32) -> (i32, i32, i32) {
    %c0_i32 = arith.constant 0 : i32
    %c0_i32_0 = arith.constant 0 : i32
    %c0_i32_1 = arith.constant 0 : i32
    return %arg0, %c0_i32, %c0_i32_0 : i32, i32, i32
  }
  func.func @transform_6(%arg0: i32) -> (i32, i32, i32) {
    %c0_i32 = arith.constant 0 : i32
    %c0_i32_0 = arith.constant 0 : i32
    %c0_i32_1 = arith.constant 0 : i32
    return %arg0, %c0_i32, %c0_i32_0 : i32, i32, i32
  }
  func.func @transform_7(%arg0: i32) -> (i32, i32, i32) {
    %c0_i32 = arith.constant 0 : i32
    %c0_i32_0 = arith.constant 0 : i32
    %c0_i32_1 = arith.constant 0 : i32
    return %arg0, %c0_i32, %c0_i32_0 : i32, i32, i32
  }
}

</mosaic_0001>

<llo_original>
// kernel: custom-call.6
$region0: #{custom-call.6}
  %s0 = inlined_call_operand.vmem [shape: f32[2,8,8], index: 0, kind: input, shape index: {}]
  %s1 = inlined_call_operand.vmem [shape: f32[2,8,8], index: 1, kind: output, shape index: {}]
  $region1: #{custom-call.6} parent=0
    #allocation0 [shape = 'u8[8192]{0}', space=vmem, size = 0x2000, scoped, tag = 'operand span for operand 0']
    #allocation1 [shape = 'u8[8192]{0}', space=vmem, size = 0x2000, scoped, tag = 'operand span for operand 1']
    loop: start=0, step=1, limit=4
    $region2: #{custom-call.6} parent=1 // loop_pre_header
      _
    $region3: #{custom-call.6} parent=1 // loop_header
      %s3 = sphi 0, %s7
      %p4 = scmp.ge.s32.totalorder %s3, 4
      %s10 = sphi 0, %s29
      %s11 = sphi 0, %s25
      %s12 = sphi 0, %s21
      %s13 = sphi 0, %s10
      %s14 = sphi 0, %s11
      %s15 = sphi 0, %s12
      %s16 = sphi 0, %s13
      %s17 = sphi 0, %s14
      %s18 = sphi 0, %s15
    $region4: #{custom-call.6} parent=1 // loop_header_branch
      %6 = sbr.rel (%p4) target = $region8
    $region5: #{custom-call.6} parent=1 // loop_body
      %s8 = ssub.s32 %s3, 1
      %s9 = ssub.s32 %s3, 2
      %s19 = sadd.s32 1, %s12
      %p20 = scmp.ge.s32.totalorder %s19, 1
      %s21 = scalar_select %p20, 0, %s19
      %s22 = sadd.s32 1, %s11
      %s23 = scalar_select %p20, %s22, %s11
      %p24 = scmp.ge.s32.totalorder %s23, 1
      %s25 = scalar_select %p24, 0, %s23
      %s26 = sadd.s32 1, %s10
      %s27 = scalar_select %p24, %s26, %s10
      %p28 = scmp.ge.s32.totalorder %s27, 2
      %s29 = scalar_select %p28, 0, %s27
      %p30 = scmp.le.s32.totalorder 1, %s3
      %p31 = scmp.lt.s32.totalorder %s3, 3
      %p32 = pnand %p30, %p31
      %p33 = pneg %p32
      // Predicated region
      $region9: #{custom-call.6} parent=5 // pred_check
        _
      $region10: #{custom-call.6} parent=5 // pred_check_branch
        %35 = sbr.rel (%p32) target = $region12
      $region11: #{custom-call.6} parent=5 // pred_region
        %s36 = ssub.s32 %s3, 1
      $region12: #{custom-call.6} parent=5 // pred_fallthru
        _
      %p37 = scmp.lt.s32.totalorder %s3, 2
      // Predicated region
      $region13: #{custom-call.6} parent=5 // pred_check
        %p38 = pneg %p37
      $region14: #{custom-call.6} parent=5 // pred_check_branch
        %40 = sbr.rel (%p38) target = $region16
      $region15: #{custom-call.6} parent=5 // pred_region
        %s41 = sand.u32 %s3, 1
        %s42 = sand.u32 %s3, 1
        %s43 = smul.addr %s42, 8
        %s44 = scalar_lea.vmem [#allocation0], %s43
        %s45 = sadd.s32 %s12, %s11
        %s46 = sadd.s32 %s45, %s10
        %s47 = smul.addr %s46, 8
        %s48 = scalar_lea.vmem %s0, %s47
        // Predicated region
        $region17: #{custom-call.6} parent=15 // pred_check
          _
        $region18: #{custom-call.6} parent=15 // pred_check_branch
          %50 = sbr.rel (0) target = $region20
        $region19: #{custom-call.6} parent=15 // pred_region
          // Predicated region
          $region21: #{custom-call.6} parent=19 // pred_check
            _
          $region22: #{custom-call.6} parent=19 // pred_check_branch
            %52 = sbr.rel (0) target = $region24
          $region23: #{custom-call.6} parent=19 // pred_region
            // Predicated region
            $region36: #{custom-call.6} parent=23 // pred_check
              _
            $region37: #{custom-call.6} parent=23 // pred_check_branch
              %67 = sbr.rel (0) target = $region39
            $region38: #{custom-call.6} parent=23 // pred_region
              loop: start=0, step=1, limit=1
              $region40: #{custom-call.6} parent=38 // loop_pre_header
                _
              $region41: #{custom-call.6} parent=38 // loop_header
                %s69 = sphi 0, %s73
                %p70 = scmp.ge.s32.totalorder %s69, 1
                %s74 = sphi %s48, %s48
                %s75 = sphi %s44, %s44
              $region42: #{custom-call.6} parent=38 // loop_header_branch
                %72 = sbr.rel (%p70) target = $region46
              $region43: #{custom-call.6} parent=38 // loop_body
                %v76 = vld [vmem:[%s74] sm:$0xff]
                %77 = vst [vmem:[%s75] sm:$0xff] %v76
              $region44: #{custom-call.6} parent=38 // loop_footer
                %s73 = sadd.s32 1, %s69
              $region45: #{custom-call.6} parent=38 // loop_footer_branch
                %68 = sbr.rel target = $region41
              $region46: #{custom-call.6} parent=38 // loop_exit
                _
            $region39: #{custom-call.6} parent=23 // pred_fallthru
              _
            // Predicated region
            $region47: #{custom-call.6} parent=23 // pred_check
              _
            $region48: #{custom-call.6} parent=23 // pred_check_branch
              %79 = sbr.rel target = $region50
            $region49: #{custom-call.6} parent=23 // pred_region
              _
            $region50: #{custom-call.6} parent=23 // pred_fallthru
              _
          $region24: #{custom-call.6} parent=19 // pred_fallthru
            _
          // Predicated region
          $region25: #{custom-call.6} parent=19 // pred_check
            _
          $region26: #{custom-call.6} parent=19 // pred_check_branch
            %54 = sbr.rel target = $region28
          $region27: #{custom-call.6} parent=19 // pred_region
            loop: start=0, step=1, limit=1
            $region29: #{custom-call.6} parent=27 // loop_pre_header
              _
            $region30: #{custom-call.6} parent=27 // loop_header
              %s57 = sphi 0, %s61
              %p58 = scmp.ge.s32.totalorder %s57, 1
              %s62 = sphi %s48, %s48
              %s63 = sphi %s44, %s44
            $region31: #{custom-call.6} parent=27 // loop_header_branch
              %60 = sbr.rel (%p58) target = $region35
            $region32: #{custom-call.6} parent=27 // loop_body
              %v64 = vld [vmem:[%s62] sm:$0xff]
              %65 = vst [vmem:[%s63] sm:$0xff] %v64
            $region33: #{custom-call.6} parent=27 // loop_footer
              %s61 = sadd.s32 1, %s57
            $region34: #{custom-call.6} parent=27 // loop_footer_branch
              %56 = sbr.rel target = $region30
            $region35: #{custom-call.6} parent=27 // loop_exit
              _
          $region28: #{custom-call.6} parent=19 // pred_fallthru
            _
        $region20: #{custom-call.6} parent=15 // pred_fallthru
          _
        %80 = vnop
      $region16: #{custom-call.6} parent=5 // pred_fallthru
        _
      %p81 = scmp.le.s32.totalorder 1, %s3
      %p82 = scmp.lt.s32.totalorder %s3, 3
      %p83 = pnand %p81, %p82
      %p84 = pneg %p83
      // Predicated region
      $region51: #{custom-call.6} parent=5 // pred_check
        _
      $region52: #{custom-call.6} parent=5 // pred_check_branch
        %86 = sbr.rel (%p83) target = $region54
      $region53: #{custom-call.6} parent=5 // pred_region
        %s87 = ssub.s32 %s3, 1
        %s88 = sand.u32 %s8, 1
        %s89 = sand.u32 %s8, 1
        %s90 = smul.addr %s89, 8
        %s91 = scalar_lea.vmem [#allocation0], %s90
        %s92 = sand.u32 %s8, 1
        %s93 = sand.u32 %s8, 1
        %s94 = smul.addr %s93, 8
        %s95 = scalar_lea.vmem [#allocation0], %s94
        %s96 = sand.u32 %s8, 1
        %s97 = sand.u32 %s8, 1
        %s98 = smul.addr %s97, 8
        %s99 = scalar_lea.vmem [#allocation1], %s98
        %100 = vst [vmem:[%s99] sm:$0xff] 0.0
        %vm101 = vcmask 7168
        %v102 = vld [vmem:[%s99] ss:$0 sm:$0xff]
        %v103 = vld [vmem:[%s91] ss:$0 sm:$0xff]
        %v104 = vmul.f32 %v102, %v102
        %105 = vadd.xlane.f32.xlu0 %v104
        %v106 = vpop.xlane.xlu0 %105
        %v107 = vsub.f32 %v103, %v106
        %v108 = vrsqrt.pop %v107
        %v109 = vld [vmem:[%s91] sm:$0xff]
        %v110 = vld [vmem:[%s99] sm:$0xff]
        %v111 = vmul.f32 %v110, %v102
        %112 = vadd.xlane.f32.xlu0 %v111
        %v113 = vpop.xlane.xlu0 %112
        %v114 = vsub.f32 %v109, %v113
        %v115 = vmul.f32 %v114, %v108
        %v116 = vsel %vm101, %v115, 0.0
        %v117 = vadd.f32 %v110, %v116
        %118 = vst [vmem:[%s99] sm:$0xff] %v117
        %vm119 = vcmask 15368
        %s120 = scalar_lea.vmem %s99, 1 [#allocation1]
        %v121 = vld [vmem:[%s120] ss:$0 sm:$0xff]
        %s122 = scalar_lea.vmem %s91, 1 [#allocation0]
        %v123 = vld [vmem:[%s122] ss:$0 sm:$0xff]
        %v124 = vmul.f32 %v121, %v121
        %125 = vadd.xlane.f32.xlu0 %v124
        %v126 = vpop.xlane.xlu0 %125
        %v127 = vsub.f32 %v123, %v126
        %v128 = vrsqrt.pop %v127
        %v129 = vld [vmem:[%s91] sm:$0xff]
        %v130 = vld [vmem:[%s99] sm:$0xff]
        %v131 = vmul.f32 %v130, %v121
        %132 = vadd.xlane.f32.xlu0 %v131
        %v133 = vpop.xlane.xlu0 %132
        %v134 = vsub.f32 %v129, %v133
        %v135 = vmul.f32 %v134, %v128
        %vm136 = vcmask 1047553
        %vm137 = vmand %vm119, %vm136
        %v138 = vsel %vm137, %v135, 0.0
        %v139 = vadd.f32 %v130, %v138
        %140 = vst [vmem:[%s99] sm:$0xff] %v139
        %vm141 = vcmask 23568
        %s142 = scalar_lea.vmem %s99, 2 [#allocation1]
        %v143 = vld [vmem:[%s142] ss:$0 sm:$0xff]
        %s144 = scalar_lea.vmem %s91, 2 [#allocation0]
        %v145 = vld [vmem:[%s144] ss:$0 sm:$0xff]
        %v146 = vmul.f32 %v143, %v143
        %147 = vadd.xlane.f32.xlu0 %v146
        %v148 = vpop.xlane.xlu0 %147
        %v149 = vsub.f32 %v145, %v148
        %v150 = vrsqrt.pop %v149
        %v151 = vld [vmem:[%s91] sm:$0xff]
        %v152 = vld [vmem:[%s99] sm:$0xff]
        %v153 = vmul.f32 %v152, %v143
        %154 = vadd.xlane.f32.xlu0 %v153
        %v155 = vpop.xlane.xlu0 %154
        %v156 = vsub.f32 %v151, %v155
        %v157 = vmul.f32 %v156, %v150
        %vm158 = vcmask 1047554
        %vm159 = vmand %vm141, %vm158
        %v160 = vsel %vm159, %v157, 0.0
        %v161 = vadd.f32 %v152, %v160
        %162 = vst [vmem:[%s99] sm:$0xff] %v161
        %vm163 = vcmask 31768
        %s164 = scalar_lea.vmem %s99, 3 [#allocation1]
        %v165 = vld [vmem:[%s164] ss:$0 sm:$0xff]
        %s166 = scalar_lea.vmem %s91, 3 [#allocation0]
        %v167 = vld [vmem:[%s166] ss:$0 sm:$0xff]
        %v168 = vmul.f32 %v165, %v165
        %169 = vadd.xlane.f32.xlu0 %v168
        %v170 = vpop.xlane.xlu0 %169
        %v171 = vsub.f32 %v167, %v170
        %v172 = vrsqrt.pop %v171
        %v173 = vld [vmem:[%s91] sm:$0xff]
        %v174 = vld [vmem:[%s99] sm:$0xff]
        %v175 = vmul.f32 %v174, %v165
        %176 = vadd.xlane.f32.xlu0 %v175
        %v177 = vpop.xlane.xlu0 %176
        %v178 = vsub.f32 %v173, %v177
        %v179 = vmul.f32 %v178, %v172
        %vm180 = vcmask 1047555
        %vm181 = vmand %vm163, %vm180
        %v182 = vsel %vm181, %v179, 0.0
        %v183 = vadd.f32 %v174, %v182
        %184 = vst [vmem:[%s99] sm:$0xff] %v183
        %vm185 = vcmask 39968
        %s186 = scalar_lea.vmem %s99, 4 [#allocation1]
        %v187 = vld [vmem:[%s186] ss:$0 sm:$0xff]
        %s188 = scalar_lea.vmem %s91, 4 [#allocation0]
        %v189 = vld [vmem:[%s188] ss:$0 sm:$0xff]
        %v190 = vmul.f32 %v187, %v187
        %191 = vadd.xlane.f32.xlu0 %v190
        %v192 = vpop.xlane.xlu0 %191
        %v193 = vsub.f32 %v189, %v192
        %v194 = vrsqrt.pop %v193
        %v195 = vld [vmem:[%s91] sm:$0xff]
        %v196 = vld [vmem:[%s99] sm:$0xff]
        %v197 = vmul.f32 %v196, %v187
        %198 = vadd.xlane.f32.xlu0 %v197
        %v199 = vpop.xlane.xlu0 %198
        %v200 = vsub.f32 %v195, %v199
        %v201 = vmul.f32 %v200, %v194
        %vm202 = vcmask 1047556
        %vm203 = vmand %vm185, %vm202
        %v204 = vsel %vm203, %v201, 0.0
        %v205 = vadd.f32 %v196, %v204
        %206 = vst [vmem:[%s99] sm:$0xff] %v205
        %vm207 = vcmask 48168
        %s208 = scalar_lea.vmem %s99, 5 [#allocation1]
        %v209 = vld [vmem:[%s208] ss:$0 sm:$0xff]
        %s210 = scalar_lea.vmem %s91, 5 [#allocation0]
        %v211 = vld [vmem:[%s210] ss:$0 sm:$0xff]
        %v212 = vmul.f32 %v209, %v209
        %213 = vadd.xlane.f32.xlu0 %v212
        %v214 = vpop.xlane.xlu0 %213
        %v215 = vsub.f32 %v211, %v214
        %v216 = vrsqrt.pop %v215
        %v217 = vld [vmem:[%s91] sm:$0xff]
        %v218 = vld [vmem:[%s99] sm:$0xff]
        %v219 = vmul.f32 %v218, %v209
        %220 = vadd.xlane.f32.xlu0 %v219
        %v221 = vpop.xlane.xlu0 %220
        %v222 = vsub.f32 %v217, %v221
        %v223 = vmul.f32 %v222, %v216
        %vm224 = vcmask 1047557
        %vm225 = vmand %vm207, %vm224
        %v226 = vsel %vm225, %v223, 0.0
        %v227 = vadd.f32 %v218, %v226
        %228 = vst [vmem:[%s99] sm:$0xff] %v227
        %vm229 = vcmask 56368
        %s230 = scalar_lea.vmem %s99, 6 [#allocation1]
        %v231 = vld [vmem:[%s230] ss:$0 sm:$0xff]
        %s232 = scalar_lea.vmem %s91, 6 [#allocation0]
        %v233 = vld [vmem:[%s232] ss:$0 sm:$0xff]
        %v234 = vmul.f32 %v231, %v231
        %235 = vadd.xlane.f32.xlu0 %v234
        %v236 = vpop.xlane.xlu0 %235
        %v237 = vsub.f32 %v233, %v236
        %v238 = vrsqrt.pop %v237
        %v239 = vld [vmem:[%s91] sm:$0xff]
        %v240 = vld [vmem:[%s99] sm:$0xff]
        %v241 = vmul.f32 %v240, %v231
        %242 = vadd.xlane.f32.xlu0 %v241
        %v243 = vpop.xlane.xlu0 %242
        %v244 = vsub.f32 %v239, %v243
        %v245 = vmul.f32 %v244, %v238
        %vm246 = vcmask 1047558
        %vm247 = vmand %vm229, %vm246
        %v248 = vsel %vm247, %v245, 0.0
        %v249 = vadd.f32 %v240, %v248
        %250 = vst [vmem:[%s99] sm:$0xff] %v249
        %vm251 = vcmask 64568
        %s252 = scalar_lea.vmem %s99, 7 [#allocation1]
        %v253 = vld [vmem:[%s252] ss:$0 sm:$0xff]
        %s254 = scalar_lea.vmem %s91, 7 [#allocation0]
        %v255 = vld [vmem:[%s254] ss:$0 sm:$0xff]
        %v256 = vmul.f32 %v253, %v253
        %257 = vadd.xlane.f32.xlu0 %v256
        %v258 = vpop.xlane.xlu0 %257
        %v259 = vsub.f32 %v255, %v258
        %v260 = vrsqrt.pop %v259
        %v261 = vld [vmem:[%s91] sm:$0xff]
        %v262 = vld [vmem:[%s99] sm:$0xff]
        %v263 = vmul.f32 %v262, %v253
        %264 = vadd.xlane.f32.xlu0 %v263
        %v265 = vpop.xlane.xlu0 %264
        %v266 = vsub.f32 %v261, %v265
        %v267 = vmul.f32 %v266, %v260
        %vm268 = vcmask 1047559
        %vm269 = vmand %vm251, %vm268
        %v270 = vsel %vm269, %v267, 0.0
        %v271 = vadd.f32 %v262, %v270
        %272 = vst [vmem:[%s99] sm:$0xff] %v271
        %s273 = sand.u32 %s8, 1
        %s274 = sand.u32 %s8, 1
        %s275 = smul.addr %s274, 8
        %s276 = scalar_lea.vmem [#allocation1], %s275
        %s277 = sadd.s32 %s15, %s14
        %s278 = sadd.s32 %s277, %s13
        %s279 = smul.addr %s278, 8
        %s280 = scalar_lea.vmem %s1, %s279
        // Predicated region
        $region55: #{custom-call.6} parent=53 // pred_check
          _
        $region56: #{custom-call.6} parent=53 // pred_check_branch
          %282 = sbr.rel (0) target = $region58
        $region57: #{custom-call.6} parent=53 // pred_region
          // Predicated region
          $region59: #{custom-call.6} parent=57 // pred_check
            _
          $region60: #{custom-call.6} parent=57 // pred_check_branch
            %284 = sbr.rel (0) target = $region62
          $region61: #{custom-call.6} parent=57 // pred_region
            // Predicated region
            $region74: #{custom-call.6} parent=61 // pred_check
              _
            $region75: #{custom-call.6} parent=61 // pred_check_branch
              %299 = sbr.rel (0) target = $region77
            $region76: #{custom-call.6} parent=61 // pred_region
              loop: start=0, step=1, limit=1
              $region78: #{custom-call.6} parent=76 // loop_pre_header
                _
              $region79: #{custom-call.6} parent=76 // loop_header
                %s301 = sphi 0, %s305
                %p302 = scmp.ge.s32.totalorder %s301, 1
                %s306 = sphi %s276, %s276
                %s307 = sphi %s280, %s280
              $region80: #{custom-call.6} parent=76 // loop_header_branch
                %304 = sbr.rel (%p302) target = $region84
              $region81: #{custom-call.6} parent=76 // loop_body
                %v308 = vld [vmem:[%s306] sm:$0xff]
                %309 = vst [vmem:[%s307] sm:$0xff] %v308
              $region82: #{custom-call.6} parent=76 // loop_footer
                %s305 = sadd.s32 1, %s301
              $region83: #{custom-call.6} parent=76 // loop_footer_branch
                %300 = sbr.rel target = $region79
              $region84: #{custom-call.6} parent=76 // loop_exit
                _
            $region77: #{custom-call.6} parent=61 // pred_fallthru
              _
            // Predicated region
            $region85: #{custom-call.6} parent=61 // pred_check
              _
            $region86: #{custom-call.6} parent=61 // pred_check_branch
              %311 = sbr.rel target = $region88
            $region87: #{custom-call.6} parent=61 // pred_region
              _
            $region88: #{custom-call.6} parent=61 // pred_fallthru
              _
          $region62: #{custom-call.6} parent=57 // pred_fallthru
            _
          // Predicated region
          $region63: #{custom-call.6} parent=57 // pred_check
            _
          $region64: #{custom-call.6} parent=57 // pred_check_branch
            %286 = sbr.rel target = $region66
          $region65: #{custom-call.6} parent=57 // pred_region
            loop: start=0, step=1, limit=1
            $region67: #{custom-call.6} parent=65 // loop_pre_header
              _
            $region68: #{custom-call.6} parent=65 // loop_header
              %s289 = sphi 0, %s293
              %p290 = scmp.ge.s32.totalorder %s289, 1
              %s294 = sphi %s276, %s276
              %s295 = sphi %s280, %s280
            $region69: #{custom-call.6} parent=65 // loop_header_branch
              %292 = sbr.rel (%p290) target = $region73
            $region70: #{custom-call.6} parent=65 // loop_body
              %v296 = vld [vmem:[%s294] sm:$0xff]
              %297 = vst [vmem:[%s295] sm:$0xff] %v296
            $region71: #{custom-call.6} parent=65 // loop_footer
              %s293 = sadd.s32 1, %s289
            $region72: #{custom-call.6} parent=65 // loop_footer_branch
              %288 = sbr.rel target = $region68
            $region73: #{custom-call.6} parent=65 // loop_exit
              _
          $region66: #{custom-call.6} parent=57 // pred_fallthru
            _
        $region58: #{custom-call.6} parent=53 // pred_fallthru
          _
        %312 = vnop
      $region54: #{custom-call.6} parent=5 // pred_fallthru
        _
      %p313 = scmp.le.s32.totalorder 2, %s3
      // Predicated region
      $region89: #{custom-call.6} parent=5 // pred_check
        %p314 = pneg %p313
      $region90: #{custom-call.6} parent=5 // pred_check_branch
        %316 = sbr.rel (%p314) target = $region92
      $region91: #{custom-call.6} parent=5 // pred_region
        %s317 = ssub.s32 %s3, 2
        %s318 = sand.u32 %s9, 1
        %s319 = sand.u32 %s9, 1
        %s320 = smul.addr %s319, 8
        %s321 = scalar_lea.vmem [#allocation1], %s320
      $region92: #{custom-call.6} parent=5 // pred_fallthru
        _
    $region6: #{custom-call.6} parent=1 // loop_footer
      %s7 = sadd.s32 1, %s3
    $region7: #{custom-call.6} parent=1 // loop_footer_branch
      %2 = sbr.rel target = $region3
    $region8: #{custom-call.6} parent=1 // loop_exit
      _

// kernel: custom-call.7
$region0: #{custom-call.7}
  %s0 = inlined_call_operand.vmem [shape: f32[2,1,8,8], index: 0, kind: input, shape index: {}]
  %s1 = inlined_call_operand.vmem [shape: f32[2,1,8,8], index: 1, kind: output, shape index: {}]
  $region1: #{custom-call.7} parent=0
    #allocation0 [shape = 'u8[8192]{0}', space=vmem, size = 0x2000, scoped, tag = 'operand span for operand 0']
    #allocation1 [shape = 'u8[8192]{0}', space=vmem, size = 0x2000, scoped, tag = 'operand span for operand 1']
    loop: start=0, step=1, limit=4
    $region2: #{custom-call.7} parent=1 // loop_pre_header
      _
    $region3: #{custom-call.7} parent=1 // loop_header
      %s3 = sphi 0, %s7
      %p4 = scmp.ge.s32.totalorder %s3, 4
      %s10 = sphi 0, %s36
      %s11 = sphi 0, %s32
      %s12 = sphi 0, %s28
      %s13 = sphi 0, %s24
      %s14 = sphi 0, %s10
      %s15 = sphi 0, %s11
      %s16 = sphi 0, %s12
      %s17 = sphi 0, %s13
      %s18 = sphi 0, %s14
      %s19 = sphi 0, %s15
      %s20 = sphi 0, %s16
      %s21 = sphi 0, %s17
    $region4: #{custom-call.7} parent=1 // loop_header_branch
      %6 = sbr.rel (%p4) target = $region8
    $region5: #{custom-call.7} parent=1 // loop_body
      %s8 = ssub.s32 %s3, 1
      %s9 = ssub.s32 %s3, 2
      %s22 = sadd.s32 1, %s13
      %p23 = scmp.ge.s32.totalorder %s22, 1
      %s24 = scalar_select %p23, 0, %s22
      %s25 = sadd.s32 1, %s12
      %s26 = scalar_select %p23, %s25, %s12
      %p27 = scmp.ge.s32.totalorder %s26, 1
      %s28 = scalar_select %p27, 0, %s26
      %s29 = sadd.s32 1, %s11
      %s30 = scalar_select %p27, %s29, %s11
      %p31 = scmp.ge.s32.totalorder %s30, 1
      %s32 = scalar_select %p31, 0, %s30
      %s33 = sadd.s32 1, %s10
      %s34 = scalar_select %p31, %s33, %s10
      %p35 = scmp.ge.s32.totalorder %s34, 2
      %s36 = scalar_select %p35, 0, %s34
      %p37 = scmp.le.s32.totalorder 1, %s3
      %p38 = scmp.lt.s32.totalorder %s3, 3
      %p39 = pnand %p37, %p38
      %p40 = pneg %p39
      // Predicated region
      $region9: #{custom-call.7} parent=5 // pred_check
        _
      $region10: #{custom-call.7} parent=5 // pred_check_branch
        %42 = sbr.rel (%p39) target = $region12
      $region11: #{custom-call.7} parent=5 // pred_region
        %s43 = ssub.s32 %s3, 1
      $region12: #{custom-call.7} parent=5 // pred_fallthru
        _
      %p44 = scmp.lt.s32.totalorder %s3, 2
      // Predicated region
      $region13: #{custom-call.7} parent=5 // pred_check
        %p45 = pneg %p44
      $region14: #{custom-call.7} parent=5 // pred_check_branch
        %47 = sbr.rel (%p45) target = $region16
      $region15: #{custom-call.7} parent=5 // pred_region
        %s48 = sand.u32 %s3, 1
        %s49 = sand.u32 %s3, 1
        %s50 = smul.addr %s49, 8
        %s51 = scalar_lea.vmem [#allocation0], %s50
        %s52 = sadd.s32 %s13, %s12
        %s53 = sadd.s32 %s52, %s11
        %s54 = sadd.s32 %s53, %s10
        %s55 = smul.addr %s54, 8
        %s56 = scalar_lea.vmem %s0, %s55
        // Predicated region
        $region17: #{custom-call.7} parent=15 // pred_check
          _
        $region18: #{custom-call.7} parent=15 // pred_check_branch
          %58 = sbr.rel (0) target = $region20
        $region19: #{custom-call.7} parent=15 // pred_region
          // Predicated region
          $region21: #{custom-call.7} parent=19 // pred_check
            _
          $region22: #{custom-call.7} parent=19 // pred_check_branch
            %60 = sbr.rel (0) target = $region24
          $region23: #{custom-call.7} parent=19 // pred_region
            // Predicated region
            $region36: #{custom-call.7} parent=23 // pred_check
              _
            $region37: #{custom-call.7} parent=23 // pred_check_branch
              %75 = sbr.rel (0) target = $region39
            $region38: #{custom-call.7} parent=23 // pred_region
              loop: start=0, step=1, limit=1
              $region40: #{custom-call.7} parent=38 // loop_pre_header
                _
              $region41: #{custom-call.7} parent=38 // loop_header
                %s77 = sphi 0, %s81
                %p78 = scmp.ge.s32.totalorder %s77, 1
                %s82 = sphi %s56, %s56
                %s83 = sphi %s51, %s51
              $region42: #{custom-call.7} parent=38 // loop_header_branch
                %80 = sbr.rel (%p78) target = $region46
              $region43: #{custom-call.7} parent=38 // loop_body
                %v84 = vld [vmem:[%s82] sm:$0xff]
                %85 = vst [vmem:[%s83] sm:$0xff] %v84
              $region44: #{custom-call.7} parent=38 // loop_footer
                %s81 = sadd.s32 1, %s77
              $region45: #{custom-call.7} parent=38 // loop_footer_branch
                %76 = sbr.rel target = $region41
              $region46: #{custom-call.7} parent=38 // loop_exit
                _
            $region39: #{custom-call.7} parent=23 // pred_fallthru
              _
            // Predicated region
            $region47: #{custom-call.7} parent=23 // pred_check
              _
            $region48: #{custom-call.7} parent=23 // pred_check_branch
              %87 = sbr.rel target = $region50
            $region49: #{custom-call.7} parent=23 // pred_region
              _
            $region50: #{custom-call.7} parent=23 // pred_fallthru
              _
          $region24: #{custom-call.7} parent=19 // pred_fallthru
            _
          // Predicated region
          $region25: #{custom-call.7} parent=19 // pred_check
            _
          $region26: #{custom-call.7} parent=19 // pred_check_branch
            %62 = sbr.rel target = $region28
          $region27: #{custom-call.7} parent=19 // pred_region
            loop: start=0, step=1, limit=1
            $region29: #{custom-call.7} parent=27 // loop_pre_header
              _
            $region30: #{custom-call.7} parent=27 // loop_header
              %s65 = sphi 0, %s69
              %p66 = scmp.ge.s32.totalorder %s65, 1
              %s70 = sphi %s56, %s56
              %s71 = sphi %s51, %s51
            $region31: #{custom-call.7} parent=27 // loop_header_branch
              %68 = sbr.rel (%p66) target = $region35
            $region32: #{custom-call.7} parent=27 // loop_body
              %v72 = vld [vmem:[%s70] sm:$0xff]
              %73 = vst [vmem:[%s71] sm:$0xff] %v72
            $region33: #{custom-call.7} parent=27 // loop_footer
              %s69 = sadd.s32 1, %s65
            $region34: #{custom-call.7} parent=27 // loop_footer_branch
              %64 = sbr.rel target = $region30
            $region35: #{custom-call.7} parent=27 // loop_exit
              _
          $region28: #{custom-call.7} parent=19 // pred_fallthru
            _
        $region20: #{custom-call.7} parent=15 // pred_fallthru
          _
        %88 = vnop
      $region16: #{custom-call.7} parent=5 // pred_fallthru
        _
      %p89 = scmp.le.s32.totalorder 1, %s3
      %p90 = scmp.lt.s32.totalorder %s3, 3
      %p91 = pnand %p89, %p90
      %p92 = pneg %p91
      // Predicated region
      $region51: #{custom-call.7} parent=5 // pred_check
        _
      $region52: #{custom-call.7} parent=5 // pred_check_branch
        %94 = sbr.rel (%p91) target = $region54
      $region53: #{custom-call.7} parent=5 // pred_region
        #allocation2 [shape = 'f32[8,8]{1,0}', space=vmem, size = 0x1000, scoped, tag = 'rescaled input a']
        %s95 = ssub.s32 %s3, 1
        %s96 = sand.u32 %s8, 1
        %s97 = sand.u32 %s8, 1
        %s98 = smul.addr %s97, 8
        %s99 = scalar_lea.vmem [#allocation0], %s98
        %s100 = sand.u32 %s8, 1
        %s101 = sand.u32 %s8, 1
        %s102 = smul.addr %s101, 8
        %s103 = scalar_lea.vmem [#allocation0], %s102
        %s104 = sand.u32 %s8, 1
        %s105 = sand.u32 %s8, 1
        %s106 = smul.addr %s105, 8
        %s107 = scalar_lea.vmem [#allocation1], %s106
        %v108 = vlaneseq
        %v109 = vand.u32 %v108, 127
        %vm110 = vcmp.lt.s32.totalorder %v109, 8
        %v111 = vlaneseq
        %v112 = vshrl.u32 %v111, 7
        %vm114 = vcmp.eq.s32.totalorder %v112, %v109
        %v115 = vld [vmem:[%s99] sm:$0xff]
        %v116 = vsel %vm114, %v115, 0.0
        %117 = vadd.xlane.f32.xlu0 %v116
        %v118 = vpop.xlane.xlu0 %117
        %vm119 = vcmp.ge.s32.totalorder %v112, %v109
        %vm120 = vmand %vm119, %vm110
        %v121 = vsel %vm120, %v115, 0.0
        %v122 = vrcp.pop %v118
        %v123 = vmul.f32 %v121, %v122
        %124 = vst [vmem:[#allocation2] sm:$0xff] %v123
        %v125 = vlaneseq
        %v126 = vand.u32 %v125, 127
        %v127 = vlaneseq
        %v128 = vshrl.u32 %v127, 7
        %vm130 = vcmp.eq.s32.totalorder %v126, %v128
        %v131 = vlaneseq
        %v132 = vand.u32 %v131, 127
        %vm133 = vcmp.eq.s32.totalorder %v132, 0
        %v134 = vsel %vm133, 1.0, -1.0
        %v135 = vsel %vm130, %v134, 0.0
        %s136 = scalar_lea.vmem [#allocation2], 1
        %v137 = vld [vmem:[%s136] ss:$0 sm:$0xff]
        %v138 = vxor.u32 %v137, 2147483648
        %v139 = vlaneseq
        %v140 = vand.u32 %v139, 127
        %vm141 = vcmp.eq.s32.totalorder %v140, 1
        %v142 = vmul.f32 %v138, %v135
        %143 = vadd.xlane.f32.xlu0 %v142
        %v144 = vpop.xlane.xlu0 %143
        %v145 = vsel %vm141, %v144, %v135
        %s146 = scalar_lea.vmem [#allocation2], 2
        %v147 = vld [vmem:[%s146] ss:$0 sm:$0xff]
        %v148 = vxor.u32 %v147, 2147483648
        %v149 = vlaneseq
        %v150 = vand.u32 %v149, 127
        %vm151 = vcmp.eq.s32.totalorder %v150, 2
        %v152 = vmul.f32 %v148, %v145
        %153 = vadd.xlane.f32.xlu0 %v152
        %v154 = vpop.xlane.xlu0 %153
        %v155 = vsel %vm151, %v154, %v145
        %s156 = scalar_lea.vmem [#allocation2], 3
        %v157 = vld [vmem:[%s156] ss:$0 sm:$0xff]
        %v158 = vxor.u32 %v157, 2147483648
        %v159 = vlaneseq
        %v160 = vand.u32 %v159, 127
        %vm161 = vcmp.eq.s32.totalorder %v160, 3
        %v162 = vmul.f32 %v158, %v155
        %163 = vadd.xlane.f32.xlu0 %v162
        %v164 = vpop.xlane.xlu0 %163
        %v165 = vsel %vm161, %v164, %v155
        %s166 = scalar_lea.vmem [#allocation2], 4
        %v167 = vld [vmem:[%s166] ss:$0 sm:$0xff]
        %v168 = vxor.u32 %v167, 2147483648
        %v169 = vlaneseq
        %v170 = vand.u32 %v169, 127
        %vm171 = vcmp.eq.s32.totalorder %v170, 4
        %v172 = vmul.f32 %v168, %v165
        %173 = vadd.xlane.f32.xlu0 %v172
        %v174 = vpop.xlane.xlu0 %173
        %v175 = vsel %vm171, %v174, %v165
        %s176 = scalar_lea.vmem [#allocation2], 5
        %v177 = vld [vmem:[%s176] ss:$0 sm:$0xff]
        %v178 = vxor.u32 %v177, 2147483648
        %v179 = vlaneseq
        %v180 = vand.u32 %v179, 127
        %vm181 = vcmp.eq.s32.totalorder %v180, 5
        %v182 = vmul.f32 %v178, %v175
        %183 = vadd.xlane.f32.xlu0 %v182
        %v184 = vpop.xlane.xlu0 %183
        %v185 = vsel %vm181, %v184, %v175
        %s186 = scalar_lea.vmem [#allocation2], 6
        %v187 = vld [vmem:[%s186] ss:$0 sm:$0xff]
        %v188 = vxor.u32 %v187, 2147483648
        %v189 = vlaneseq
        %v190 = vand.u32 %v189, 127
        %vm191 = vcmp.eq.s32.totalorder %v190, 6
        %v192 = vmul.f32 %v188, %v185
        %193 = vadd.xlane.f32.xlu0 %v192
        %v194 = vpop.xlane.xlu0 %193
        %v195 = vsel %vm191, %v194, %v185
        %s196 = scalar_lea.vmem [#allocation2], 7
        %v197 = vld [vmem:[%s196] ss:$0 sm:$0xff]
        %v198 = vxor.u32 %v197, 2147483648
        %v199 = vlaneseq
        %v200 = vand.u32 %v199, 127
        %vm201 = vcmp.eq.s32.totalorder %v200, 7
        %v202 = vmul.f32 %v198, %v195
        %203 = vadd.xlane.f32.xlu0 %v202
        %v204 = vpop.xlane.xlu0 %203
        %v205 = vsel %vm201, %v204, %v195
        %v206 = vrcp.pop %v118
        %v207 = vmul.f32 %v205, %v206
        %vm208 = vweird.f32 %v118
        %v209 = vsel %vm208, %v205, %v207
        %210 = vst [vmem:[%s107] sm:$0xff] %v209
        %s211 = sand.u32 %s8, 1
        %s212 = sand.u32 %s8, 1
        %s213 = smul.addr %s212, 8
        %s214 = scalar_lea.vmem [#allocation1], %s213
        %s215 = sadd.s32 %s17, %s16
        %s216 = sadd.s32 %s215, %s15
        %s217 = sadd.s32 %s216, %s14
        %s218 = smul.addr %s217, 8
        %s219 = scalar_lea.vmem %s1, %s218
        // Predicated region
        $region55: #{custom-call.7} parent=53 // pred_check
          _
        $region56: #{custom-call.7} parent=53 // pred_check_branch
          %221 = sbr.rel (0) target = $region58
        $region57: #{custom-call.7} parent=53 // pred_region
          // Predicated region
          $region59: #{custom-call.7} parent=57 // pred_check
            _
          $region60: #{custom-call.7} parent=57 // pred_check_branch
            %223 = sbr.rel (0) target = $region62
          $region61: #{custom-call.7} parent=57 // pred_region
            // Predicated region
            $region74: #{custom-call.7} parent=61 // pred_check
              _
            $region75: #{custom-call.7} parent=61 // pred_check_branch
              %238 = sbr.rel (0) target = $region77
            $region76: #{custom-call.7} parent=61 // pred_region
              loop: start=0, step=1, limit=1
              $region78: #{custom-call.7} parent=76 // loop_pre_header
                _
              $region79: #{custom-call.7} parent=76 // loop_header
                %s240 = sphi 0, %s244
                %p241 = scmp.ge.s32.totalorder %s240, 1
                %s245 = sphi %s214, %s214
                %s246 = sphi %s219, %s219
              $region80: #{custom-call.7} parent=76 // loop_header_branch
                %243 = sbr.rel (%p241) target = $region84
              $region81: #{custom-call.7} parent=76 // loop_body
                %v247 = vld [vmem:[%s245] sm:$0xff]
                %248 = vst [vmem:[%s246] sm:$0xff] %v247
              $region82: #{custom-call.7} parent=76 // loop_footer
                %s244 = sadd.s32 1, %s240
              $region83: #{custom-call.7} parent=76 // loop_footer_branch
                %239 = sbr.rel target = $region79
              $region84: #{custom-call.7} parent=76 // loop_exit
                _
            $region77: #{custom-call.7} parent=61 // pred_fallthru
              _
            // Predicated region
            $region85: #{custom-call.7} parent=61 // pred_check
              _
            $region86: #{custom-call.7} parent=61 // pred_check_branch
              %250 = sbr.rel target = $region88
            $region87: #{custom-call.7} parent=61 // pred_region
              _
            $region88: #{custom-call.7} parent=61 // pred_fallthru
              _
          $region62: #{custom-call.7} parent=57 // pred_fallthru
            _
          // Predicated region
          $region63: #{custom-call.7} parent=57 // pred_check
            _
          $region64: #{custom-call.7} parent=57 // pred_check_branch
            %225 = sbr.rel target = $region66
          $region65: #{custom-call.7} parent=57 // pred_region
            loop: start=0, step=1, limit=1
            $region67: #{custom-call.7} parent=65 // loop_pre_header
              _
            $region68: #{custom-call.7} parent=65 // loop_header
              %s228 = sphi 0, %s232
              %p229 = scmp.ge.s32.totalorder %s228, 1
              %s233 = sphi %s214, %s214
              %s234 = sphi %s219, %s219
            $region69: #{custom-call.7} parent=65 // loop_header_branch
              %231 = sbr.rel (%p229) target = $region73
            $region70: #{custom-call.7} parent=65 // loop_body
              %v235 = vld [vmem:[%s233] sm:$0xff]
              %236 = vst [vmem:[%s234] sm:$0xff] %v235
            $region71: #{custom-call.7} parent=65 // loop_footer
              %s232 = sadd.s32 1, %s228
            $region72: #{custom-call.7} parent=65 // loop_footer_branch
              %227 = sbr.rel target = $region68
            $region73: #{custom-call.7} parent=65 // loop_exit
              _
          $region66: #{custom-call.7} parent=57 // pred_fallthru
            _
        $region58: #{custom-call.7} parent=53 // pred_fallthru
          _
        %251 = vnop
      $region54: #{custom-call.7} parent=5 // pred_fallthru
        _
      %p252 = scmp.le.s32.totalorder 2, %s3
      // Predicated region
      $region89: #{custom-call.7} parent=5 // pred_check
        %p253 = pneg %p252
      $region90: #{custom-call.7} parent=5 // pred_check_branch
        %255 = sbr.rel (%p253) target = $region92
      $region91: #{custom-call.7} parent=5 // pred_region
        %s256 = ssub.s32 %s3, 2
        %s257 = sand.u32 %s9, 1
        %s258 = sand.u32 %s9, 1
        %s259 = smul.addr %s258, 8
        %s260 = scalar_lea.vmem [#allocation1], %s259
      $region92: #{custom-call.7} parent=5 // pred_fallthru
        _
    $region6: #{custom-call.7} parent=1 // loop_footer
      %s7 = sadd.s32 1, %s3
    $region7: #{custom-call.7} parent=1 // loop_footer_branch
      %2 = sbr.rel target = $region3
    $region8: #{custom-call.7} parent=1 // loop_exit
      _

// kernel: gp_stream_forward.2
$region0: #{gp_stream_forward.2}
  #allocation0 [shape = 'u32[]', space=smem, size = 0x4, offset = 0x4, fixed_abs, tag = 'smem constant byte address 0x4 - core index']
  #allocation1 [shape = 'u32[144,128]{1,0:T(1,128)}', space=vmem, size = 0x12000, scoped, tag = 'internal scratch']
  %s0 = inlined_call_operand.vmem [shape: f32[2,1,4], index: 0, kind: input, shape index: {}]
  %s1 = inlined_call_operand.vmem [shape: f32[2,8,2], index: 1, kind: input, shape index: {}]
  %s2 = inlined_call_operand.vmem [shape: f32[2,2,8], index: 2, kind: input, shape index: {}]
  %s3 = inlined_call_operand.vmem [shape: f32[2,8,8], index: 3, kind: output, shape index: {}]
  %s4 = sld [smem:[#allocation0]]
  $region45: #{gp_stream_forward.2} parent=0
    _
  %s6 = ssub.s32 1, %s4
  %s7 = scalar_select 0, %s6, %s4
  loop: start=0, step=1, limit=4
  $region2: #{gp_stream_forward.2} parent=0 // loop_pre_header
    _
  $region3: #{gp_stream_forward.2} parent=0 // loop_header
    %s9 = sphi 0, %s13
    %p10 = scmp.ge.s32.totalorder %s9, 4
    %s19 = sphi 0, %s21
    %s22 = sphi 0, %s19
    %s23 = sphi 0, %s22
    %s39 = sphi 0, %s23
    %s45 = sphi 0, %s47
    %s48 = sphi 0, %s45
    %s49 = sphi 0, %s48
    %s65 = sphi 0, %s49
    %s71 = sphi 0, %s73
    %s74 = sphi 0, %s71
    %s75 = sphi 0, %s74
    %s91 = sphi 0, %s75
    %s97 = sphi 0, %s99
    %s100 = sphi 0, %s97
    %s101 = sphi 0, %s100
    %s117 = sphi 0, %s101
  $region4: #{gp_stream_forward.2} parent=0 // loop_header_branch
    %12 = sbr.rel (%p10) target = $region8
  $region5: #{gp_stream_forward.2} parent=0 // loop_body
    %s14 = ssub.s32 %s9, 1
    %s15 = ssub.s32 %s9, 2
    %s16 = sadd.s32 %s9, 1
    %s17 = ssub.s32 %s9, %s16
    %p18 = scmp.eq.s32.totalorder %s17, 0
    %s20 = sadd.s32 %s19, 1
    %s21 = scalar_select %p18, %s19, %s20
    %p24 = pneg %p18
    %p25 = scmp.eq.s32.totalorder %s9, 1
    %p26 = por %p24, %p25
    %p27 = scmp.ne.s32.totalorder %s19, %s22
    %p28 = scmp.eq.s32.totalorder %s9, 0
    %p29 = por %p27, %p28
    %p30 = scmp.ne.s32.totalorder %s19, %s22
    %p31 = scmp.eq.s32.totalorder %s14, 1
    %p32 = por %p30, %p31
    %p33 = scmp.ne.s32.totalorder %s22, %s23
    %p34 = scmp.eq.s32.totalorder %s14, 0
    %p35 = por %p33, %p34
    %p36 = scmp.ne.s32.totalorder %s22, %s23
    %p37 = scmp.eq.s32.totalorder %s15, 1
    %p38 = por %p36, %p37
    %p40 = scmp.ne.s32.totalorder %s23, %s39
    %p41 = scmp.eq.s32.totalorder %s15, 0
    %p42 = por %p40, %p41
    %s43 = ssub.s32 %s9, %s16
    %p44 = scmp.eq.s32.totalorder %s43, 0
    %s46 = sadd.s32 %s45, 1
    %s47 = scalar_select %p44, %s45, %s46
    %p50 = pneg %p44
    %p51 = scmp.eq.s32.totalorder %s9, 1
    %p52 = por %p50, %p51
    %p53 = scmp.ne.s32.totalorder %s45, %s48
    %p54 = scmp.eq.s32.totalorder %s9, 0
    %p55 = por %p53, %p54
    %p56 = scmp.ne.s32.totalorder %s45, %s48
    %p57 = scmp.eq.s32.totalorder %s14, 1
    %p58 = por %p56, %p57
    %p59 = scmp.ne.s32.totalorder %s48, %s49
    %p60 = scmp.eq.s32.totalorder %s14, 0
    %p61 = por %p59, %p60
    %p62 = scmp.ne.s32.totalorder %s48, %s49
    %p63 = scmp.eq.s32.totalorder %s15, 1
    %p64 = por %p62, %p63
    %p66 = scmp.ne.s32.totalorder %s49, %s65
    %p67 = scmp.eq.s32.totalorder %s15, 0
    %p68 = por %p66, %p67
    %s69 = ssub.s32 %s9, %s16
    %p70 = scmp.eq.s32.totalorder %s69, 0
    %s72 = sadd.s32 %s71, 1
    %s73 = scalar_select %p70, %s71, %s72
    %p76 = pneg %p70
    %p77 = scmp.eq.s32.totalorder %s9, 1
    %p78 = por %p76, %p77
    %p79 = scmp.ne.s32.totalorder %s71, %s74
    %p80 = scmp.eq.s32.totalorder %s9, 0
    %p81 = por %p79, %p80
    %p82 = scmp.ne.s32.totalorder %s71, %s74
    %p83 = scmp.eq.s32.totalorder %s14, 1
    %p84 = por %p82, %p83
    %p85 = scmp.ne.s32.totalorder %s74, %s75
    %p86 = scmp.eq.s32.totalorder %s14, 0
    %p87 = por %p85, %p86
    %p88 = scmp.ne.s32.totalorder %s74, %s75
    %p89 = scmp.eq.s32.totalorder %s15, 1
    %p90 = por %p88, %p89
    %p92 = scmp.ne.s32.totalorder %s75, %s91
    %p93 = scmp.eq.s32.totalorder %s15, 0
    %p94 = por %p92, %p93
    %s95 = ssub.s32 %s9, %s16
    %p96 = scmp.eq.s32.totalorder %s95, 0
    %s98 = sadd.s32 %s97, 1
    %s99 = scalar_select %p96, %s97, %s98
    %p102 = pneg %p96
    %p103 = scmp.eq.s32.totalorder %s9, 1
    %p104 = por %p102, %p103
    %p105 = scmp.ne.s32.totalorder %s97, %s100
    %p106 = scmp.eq.s32.totalorder %s9, 0
    %p107 = por %p105, %p106
    %p108 = scmp.ne.s32.totalorder %s97, %s100
    %p109 = scmp.eq.s32.totalorder %s14, 1
    %p110 = por %p108, %p109
    %p111 = scmp.ne.s32.totalorder %s100, %s101
    %p112 = scmp.eq.s32.totalorder %s14, 0
    %p113 = por %p111, %p112
    %p114 = scmp.ne.s32.totalorder %s100, %s101
    %p115 = scmp.eq.s32.totalorder %s15, 1
    %p116 = por %p114, %p115
    %p118 = scmp.ne.s32.totalorder %s101, %s117
    %p119 = scmp.eq.s32.totalorder %s15, 0
    %p120 = por %p118, %p119
    %p121 = scmp.le.s32.totalorder 1, %s9
    %p122 = scmp.lt.s32.totalorder %s9, 3
    %p123 = pnand %p121, %p122
    %p124 = pneg %p123
    // Predicated region
    $region9: #{gp_stream_forward.2} parent=5 // pred_check
      _
    $region10: #{gp_stream_forward.2} parent=5 // pred_check_branch
      %126 = sbr.rel (%p123) target = $region12
    $region11: #{gp_stream_forward.2} parent=5 // pred_region
      %s127 = ssub.s32 %s9, 1
    $region12: #{gp_stream_forward.2} parent=5 // pred_fallthru
      _
    %p128 = scmp.lt.s32.totalorder %s9, 2
    // Predicated region
    $region13: #{gp_stream_forward.2} parent=5 // pred_check
      %p129 = pneg %p128
    $region14: #{gp_stream_forward.2} parent=5 // pred_check_branch
      %131 = sbr.rel (%p129) target = $region16
    $region15: #{gp_stream_forward.2} parent=5 // pred_region
      // Predicated region
      $region17: #{gp_stream_forward.2} parent=15 // pred_check
        %p132 = pneg %p29
      $region18: #{gp_stream_forward.2} parent=15 // pred_check_branch
        %134 = sbr.rel (%p132) target = $region20
      $region19: #{gp_stream_forward.2} parent=15 // pred_region
        %p135 = scmp.lt.s32.totalorder %s9, 1
        %s136 = scalar_select %p135, %s9, 1
        %s137 = scalar_lea.vmem %s0, %s136
      $region20: #{gp_stream_forward.2} parent=15 // pred_fallthru
        _
      // Predicated region
      $region21: #{gp_stream_forward.2} parent=15 // pred_check
        %p138 = pneg %p55
      $region22: #{gp_stream_forward.2} parent=15 // pred_check_branch
        %140 = sbr.rel (%p138) target = $region24
      $region23: #{gp_stream_forward.2} parent=15 // pred_region
        %p141 = scmp.lt.s32.totalorder %s9, 1
        %s142 = scalar_select %p141, %s9, 1
        %s143 = smul.addr %s142, 8
        %s144 = scalar_lea.vmem %s1, %s143
      $region24: #{gp_stream_forward.2} parent=15 // pred_fallthru
        _
      // Predicated region
      $region25: #{gp_stream_forward.2} parent=15 // pred_check
        %p145 = pneg %p81
      $region26: #{gp_stream_forward.2} parent=15 // pred_check_branch
        %147 = sbr.rel (%p145) target = $region28
      $region27: #{gp_stream_forward.2} parent=15 // pred_region
        %p148 = scmp.lt.s32.totalorder %s9, 1
        %s149 = scalar_select %p148, %s9, 1
        %s150 = smul.addr %s149, 2
        %s151 = scalar_lea.vmem %s2, %s150
      $region28: #{gp_stream_forward.2} parent=15 // pred_fallthru
        _
    $region16: #{gp_stream_forward.2} parent=5 // pred_fallthru
      _
    %p152 = scmp.le.s32.totalorder 1, %s9
    %p153 = scmp.lt.s32.totalorder %s9, 3
    %p154 = pnand %p152, %p153
    %p155 = pneg %p154
    // Predicated region
    $region29: #{gp_stream_forward.2} parent=5 // pred_check
      _
    $region30: #{gp_stream_forward.2} parent=5 // pred_check_branch
      %157 = sbr.rel (%p154) target = $region32
    $region31: #{gp_stream_forward.2} parent=5 // pred_region
      %s158 = ssub.s32 %s9, 1
      %p159 = scmp.lt.s32.totalorder %s14, 1
      %s160 = scalar_select %p159, %s14, 1
      %s161 = scalar_lea.vmem %s0, %s160
      %p162 = pneg %p35
      %p163 = pneg %p32
      %p164 = scmp.lt.s32.totalorder %s14, 1
      %s165 = scalar_select %p164, %s14, 1
      %s166 = smul.addr %s165, 8
      %s167 = scalar_lea.vmem %s1, %s166
      %p168 = pneg %p61
      %p169 = pneg %p58
      %p170 = scmp.lt.s32.totalorder %s14, 1
      %s171 = scalar_select %p170, %s14, 1
      %s172 = smul.addr %s171, 2
      %s173 = scalar_lea.vmem %s2, %s172
      %p174 = pneg %p87
      %p175 = pneg %p84
      %p176 = pneg %p113
      %p177 = pneg %p110
      %p178 = scmp.lt.s32.totalorder %s14, 1
      %s179 = scalar_select %p178, %s14, 1
      %s180 = smul.addr %s179, 8
      %s181 = scalar_lea.vmem %s3, %s180
      %p182 = scmp.lt.s32.totalorder %s14, 1
      %s183 = scalar_select %p182, %s14, 1
      %s184 = scalar_lea.vmem %s0, %s183
      %p185 = scmp.lt.s32.totalorder %s14, 1
      %s186 = scalar_select %p185, %s14, 1
      %s187 = smul.addr %s186, 8
      %s188 = scalar_lea.vmem %s1, %s187
      %p189 = scmp.lt.s32.totalorder %s14, 1
      %s190 = scalar_select %p189, %s14, 1
      %s191 = smul.addr %s190, 2
      %s192 = scalar_lea.vmem %s2, %s191
      %p193 = scmp.lt.s32.totalorder %s14, 1
      %s194 = scalar_select %p193, %s14, 1
      %s195 = smul.addr %s194, 8
      %s196 = scalar_lea.vmem %s3, %s195
      %v197 = vld [vmem:[%s184] sm:$0x1]
      %v198 = vmul.f32 %v197, %v197
      %v199 = vrcp.pop %v198
      %v200 = vmul.f32 -0.5, %v199
      %v201 = vld [vmem:[%s188] sm:$0xff]
      %v202 = vld [vmem:[%s192] sm:$0x3]
      %204 = vset.pattern.permute.xlu0 0
      %205 = vperm.xlu0 %204, %v201
      %v206 = vpop.permute.xlu0 %205
      %v208 = vlaneseq
      %v209 = vshrl.u32 %v208, 7
      %v210 = vsub.s32 0, %v209
      %v211 = vrot.slane %v202, %v210
      %v212 = vsub.f32 %v206, %v211
      %v213 = vmul.f32 %v212, %v212
      %214 = vset.pattern.permute.xlu0 1
      %215 = vperm.xlu0 %214, %v201
      %v216 = vpop.permute.xlu0 %215
      %v218 = vlaneseq
      %v219 = vshrl.u32 %v218, 7
      %v220 = vsub.s32 1, %v219
      %v221 = vrot.slane %v202, %v220
      %v222 = vsub.f32 %v216, %v221
      %v223 = vmul.f32 %v222, %v222
      %v224 = vadd.f32 %v213, %v223
      %v226 = vlaneseq
      %v227 = vshrl.u32 %v226, 7
      %v228 = vsub.s32 0, %v227
      %v229 = vrot.slane %v200, %v228
      %230 = vset.pattern.permute.xlu0 0
      %231 = vperm.xlu0 %230, %v229
      %v232 = vpop.permute.xlu0 %231
      %v234 = vmul.f32 %v224, %v232
      %v235 = vmul.f32 %v234, 1.442695
      %v236 = vpow.pop %v235
      %v238 = vlaneseq
      %v239 = vshrl.u32 %v238, 7
      %v240 = vsub.s32 0, %v239
      %v241 = vrot.slane %v197, %v240
      %242 = vset.pattern.permute.xlu0 1
      %243 = vperm.xlu0 %242, %v241
      %v244 = vpop.permute.xlu0 %243
      %v246 = vmul.f32 %v244, %v236
      %v247 = vlaneseq
      %v248 = vshrl.u32 %v247, 7
      %v249 = vlaneseq
      %v250 = vand.u32 %v249, 127
      %vm251 = vcmp.eq.s32.totalorder %v248, %v250
      %252 = vset.pattern.permute.xlu0 2
      %253 = vperm.xlu0 %252, %v241
      %v254 = vpop.permute.xlu0 %253
      %v256 = vadd.f32 %v246, %v254
      %v257 = vsel %vm251, %v256, %v246
      %vm258 = vcmask 64512
      %259 = vst.msk [vmem:[%s196] sm:$0xff] %vm258, %v257
      %p260 = scmp.lt.s32.totalorder %s14, 1
      %s261 = scalar_select %p260, %s14, 1
      %s262 = smul.addr %s261, 8
      %s263 = scalar_lea.vmem %s3, %s262
      // Predicated region
      $region33: #{gp_stream_forward.2} parent=31 // pred_check
        %p264 = pneg %p110
      $region34: #{gp_stream_forward.2} parent=31 // pred_check_branch
        %266 = sbr.rel (%p264) target = $region36
      $region35: #{gp_stream_forward.2} parent=31 // pred_region
        _
      $region36: #{gp_stream_forward.2} parent=31 // pred_fallthru
        _
    $region32: #{gp_stream_forward.2} parent=5 // pred_fallthru
      _
    %p267 = scmp.le.s32.totalorder 2, %s9
    // Predicated region
    $region37: #{gp_stream_forward.2} parent=5 // pred_check
      %p268 = pneg %p267
    $region38: #{gp_stream_forward.2} parent=5 // pred_check_branch
      %270 = sbr.rel (%p268) target = $region40
    $region39: #{gp_stream_forward.2} parent=5 // pred_region
      %s271 = ssub.s32 %s9, 2
      // Predicated region
      $region41: #{gp_stream_forward.2} parent=39 // pred_check
        %p272 = pneg %p116
      $region42: #{gp_stream_forward.2} parent=39 // pred_check_branch
        %274 = sbr.rel (%p272) target = $region44
      $region43: #{gp_stream_forward.2} parent=39 // pred_region
        %p275 = scmp.lt.s32.totalorder %s15, 1
        %s276 = scalar_select %p275, %s15, 1
        %s277 = smul.addr %s276, 8
        %s278 = scalar_lea.vmem %s3, %s277
      $region44: #{gp_stream_forward.2} parent=39 // pred_fallthru
        _
    $region40: #{gp_stream_forward.2} parent=5 // pred_fallthru
      _
  $region6: #{gp_stream_forward.2} parent=0 // loop_footer
    %s13 = sadd.s32 1, %s9
  $region7: #{gp_stream_forward.2} parent=0 // loop_footer_branch
    %8 = sbr.rel target = $region3
  $region8: #{gp_stream_forward.2} parent=0 // loop_exit
    _

// kernel: gp_stream_forward.3
$region0: #{gp_stream_forward.3}
  #allocation0 [shape = 'u32[]', space=smem, size = 0x4, offset = 0x4, fixed_abs, tag = 'smem constant byte address 0x4 - core index']
  #allocation1 [shape = 'u32[144,128]{1,0:T(1,128)}', space=vmem, size = 0x12000, scoped, tag = 'internal scratch']
  %s0 = inlined_call_operand.vmem [shape: f32[2,1,4], index: 0, kind: input, shape index: {}]
  %s1 = inlined_call_operand.vmem [shape: f32[2,8,2], index: 1, kind: input, shape index: {}]
  %s2 = inlined_call_operand.vmem [shape: f32[2,2,8], index: 2, kind: input, shape index: {}]
  %s3 = inlined_call_operand.vmem [shape: f32[2,2,8], index: 3, kind: input, shape index: {}]
  %s4 = inlined_call_operand.vmem [shape: f32[2,8,8], index: 4, kind: input, shape index: {}]
  %s5 = inlined_call_operand.vmem [shape: f32[2,1,8], index: 5, kind: input, shape index: {}]
  %s6 = inlined_call_operand.hbm [shape: f32[2,1,8], index: 6, kind: output, shape index: {0}]
  %s7 = inlined_call_operand.hbm [shape: f32[2,8,8], index: 7, kind: output, shape index: {1}]
  %8 = xla_tuple %s6, %s7
  %s9 = sld [smem:[#allocation0]]
  $region65: #{gp_stream_forward.3} parent=0
    _
  %s11 = ssub.s32 1, %s9
  %s12 = scalar_select 0, %s11, %s9
  $region1: #{gp_stream_forward.3} parent=0
    #allocation2 [shape = 'u8[1024]{0}', space=vmem, size = 0x400, scoped, tag = 'output window, operand 0']
    #allocation3 [shape = 's32[2]{0}', space=sflag, size = 0x8, scoped, tag = 'scoped memory for gp_stream_forward.3']
    #allocation4 [shape = 'u8[8192]{0}', space=vmem, size = 0x2000, scoped, tag = 'output window, operand 1']
    #allocation5 [shape = 's32[2]{0}', space=sflag, size = 0x8, scoped, tag = 'scoped memory for gp_stream_forward.3']
    %13 = vsyncpa [#allocation3], 0
    %s14 = scalar_lea.sflag [#allocation3], 1
    %15 = vsyncpa %s14, 0
    %16 = vsyncpa [#allocation5], 0
    %s17 = scalar_lea.sflag [#allocation5], 1
    %18 = vsyncpa %s17, 0
    loop: start=0, step=1, limit=4
    $region2: #{gp_stream_forward.3} parent=1 // loop_pre_header
      _
    $region3: #{gp_stream_forward.3} parent=1 // loop_header
      %s20 = sphi 0, %s24
      %p21 = scmp.ge.s32.totalorder %s20, 4
      %s30 = sphi 0, %s32
      %s33 = sphi 0, %s30
      %s34 = sphi 0, %s33
      %s50 = sphi 0, %s34
      %s56 = sphi 0, %s58
      %s59 = sphi 0, %s56
      %s60 = sphi 0, %s59
      %s76 = sphi 0, %s60
      %s82 = sphi 0, %s84
      %s85 = sphi 0, %s82
      %s86 = sphi 0, %s85
      %s102 = sphi 0, %s86
      %s108 = sphi 0, %s110
      %s111 = sphi 0, %s108
      %s112 = sphi 0, %s111
      %s128 = sphi 0, %s112
      %s134 = sphi 0, %s136
      %s137 = sphi 0, %s134
      %s138 = sphi 0, %s137
      %s154 = sphi 0, %s138
      %s160 = sphi 0, %s162
      %s163 = sphi 0, %s160
      %s164 = sphi 0, %s163
      %s180 = sphi 0, %s164
      %s186 = sphi 0, %s188
      %s189 = sphi 0, %s186
      %s190 = sphi 0, %s189
      %s206 = sphi 0, %s190
      %s212 = sphi 0, %s214
      %s215 = sphi 0, %s212
      %s216 = sphi 0, %s215
      %s232 = sphi 0, %s216
    $region4: #{gp_stream_forward.3} parent=1 // loop_header_branch
      %23 = sbr.rel (%p21) target = $region8
    $region5: #{gp_stream_forward.3} parent=1 // loop_body
      %s25 = ssub.s32 %s20, 1
      %s26 = ssub.s32 %s20, 2
      %s27 = sadd.s32 %s20, 1
      %s28 = ssub.s32 %s20, %s27
      %p29 = scmp.eq.s32.totalorder %s28, 0
      %s31 = sadd.s32 %s30, 1
      %s32 = scalar_select %p29, %s30, %s31
      %p35 = pneg %p29
      %p36 = scmp.eq.s32.totalorder %s20, 1
      %p37 = por %p35, %p36
      %p38 = scmp.ne.s32.totalorder %s30, %s33
      %p39 = scmp.eq.s32.totalorder %s20, 0
      %p40 = por %p38, %p39
      %p41 = scmp.ne.s32.totalorder %s30, %s33
      %p42 = scmp.eq.s32.totalorder %s25, 1
      %p43 = por %p41, %p42
      %p44 = scmp.ne.s32.totalorder %s33, %s34
      %p45 = scmp.eq.s32.totalorder %s25, 0
      %p46 = por %p44, %p45
      %p47 = scmp.ne.s32.totalorder %s33, %s34
      %p48 = scmp.eq.s32.totalorder %s26, 1
      %p49 = por %p47, %p48
      %p51 = scmp.ne.s32.totalorder %s34, %s50
      %p52 = scmp.eq.s32.totalorder %s26, 0
      %p53 = por %p51, %p52
      %s54 = ssub.s32 %s20, %s27
      %p55 = scmp.eq.s32.totalorder %s54, 0
      %s57 = sadd.s32 %s56, 1
      %s58 = scalar_select %p55, %s56, %s57
      %p61 = pneg %p55
      %p62 = scmp.eq.s32.totalorder %s20, 1
      %p63 = por %p61, %p62
      %p64 = scmp.ne.s32.totalorder %s56, %s59
      %p65 = scmp.eq.s32.totalorder %s20, 0
      %p66 = por %p64, %p65
      %p67 = scmp.ne.s32.totalorder %s56, %s59
      %p68 = scmp.eq.s32.totalorder %s25, 1
      %p69 = por %p67, %p68
      %p70 = scmp.ne.s32.totalorder %s59, %s60
      %p71 = scmp.eq.s32.totalorder %s25, 0
      %p72 = por %p70, %p71
      %p73 = scmp.ne.s32.totalorder %s59, %s60
      %p74 = scmp.eq.s32.totalorder %s26, 1
      %p75 = por %p73, %p74
      %p77 = scmp.ne.s32.totalorder %s60, %s76
      %p78 = scmp.eq.s32.totalorder %s26, 0
      %p79 = por %p77, %p78
      %s80 = ssub.s32 %s20, %s27
      %p81 = scmp.eq.s32.totalorder %s80, 0
      %s83 = sadd.s32 %s82, 1
      %s84 = scalar_select %p81, %s82, %s83
      %p87 = pneg %p81
      %p88 = scmp.eq.s32.totalorder %s20, 1
      %p89 = por %p87, %p88
      %p90 = scmp.ne.s32.totalorder %s82, %s85
      %p91 = scmp.eq.s32.totalorder %s20, 0
      %p92 = por %p90, %p91
      %p93 = scmp.ne.s32.totalorder %s82, %s85
      %p94 = scmp.eq.s32.totalorder %s25, 1
      %p95 = por %p93, %p94
      %p96 = scmp.ne.s32.totalorder %s85, %s86
      %p97 = scmp.eq.s32.totalorder %s25, 0
      %p98 = por %p96, %p97
      %p99 = scmp.ne.s32.totalorder %s85, %s86
      %p100 = scmp.eq.s32.totalorder %s26, 1
      %p101 = por %p99, %p100
      %p103 = scmp.ne.s32.totalorder %s86, %s102
      %p104 = scmp.eq.s32.totalorder %s26, 0
      %p105 = por %p103, %p104
      %s106 = ssub.s32 %s20, %s27
      %p107 = scmp.eq.s32.totalorder %s106, 0
      %s109 = sadd.s32 %s108, 1
      %s110 = scalar_select %p107, %s108, %s109
      %p113 = pneg %p107
      %p114 = scmp.eq.s32.totalorder %s20, 1
      %p115 = por %p113, %p114
      %p116 = scmp.ne.s32.totalorder %s108, %s111
      %p117 = scmp.eq.s32.totalorder %s20, 0
      %p118 = por %p116, %p117
      %p119 = scmp.ne.s32.totalorder %s108, %s111
      %p120 = scmp.eq.s32.totalorder %s25, 1
      %p121 = por %p119, %p120
      %p122 = scmp.ne.s32.totalorder %s111, %s112
      %p123 = scmp.eq.s32.totalorder %s25, 0
      %p124 = por %p122, %p123
      %p125 = scmp.ne.s32.totalorder %s111, %s112
      %p126 = scmp.eq.s32.totalorder %s26, 1
      %p127 = por %p125, %p126
      %p129 = scmp.ne.s32.totalorder %s112, %s128
      %p130 = scmp.eq.s32.totalorder %s26, 0
      %p131 = por %p129, %p130
      %s132 = ssub.s32 %s20, %s27
      %p133 = scmp.eq.s32.totalorder %s132, 0
      %s135 = sadd.s32 %s134, 1
      %s136 = scalar_select %p133, %s134, %s135
      %p139 = pneg %p133
      %p140 = scmp.eq.s32.totalorder %s20, 1
      %p141 = por %p139, %p140
      %p142 = scmp.ne.s32.totalorder %s134, %s137
      %p143 = scmp.eq.s32.totalorder %s20, 0
      %p144 = por %p142, %p143
      %p145 = scmp.ne.s32.totalorder %s134, %s137
      %p146 = scmp.eq.s32.totalorder %s25, 1
      %p147 = por %p145, %p146
      %p148 = scmp.ne.s32.totalorder %s137, %s138
      %p149 = scmp.eq.s32.totalorder %s25, 0
      %p150 = por %p148, %p149
      %p151 = scmp.ne.s32.totalorder %s137, %s138
      %p152 = scmp.eq.s32.totalorder %s26, 1
      %p153 = por %p151, %p152
      %p155 = scmp.ne.s32.totalorder %s138, %s154
      %p156 = scmp.eq.s32.totalorder %s26, 0
      %p157 = por %p155, %p156
      %s158 = ssub.s32 %s20, %s27
      %p159 = scmp.eq.s32.totalorder %s158, 0
      %s161 = sadd.s32 %s160, 1
      %s162 = scalar_select %p159, %s160, %s161
      %p165 = pneg %p159
      %p166 = scmp.eq.s32.totalorder %s20, 1
      %p167 = por %p165, %p166
      %p168 = scmp.ne.s32.totalorder %s160, %s163
      %p169 = scmp.eq.s32.totalorder %s20, 0
      %p170 = por %p168, %p169
      %p171 = scmp.ne.s32.totalorder %s160, %s163
      %p172 = scmp.eq.s32.totalorder %s25, 1
      %p173 = por %p171, %p172
      %p174 = scmp.ne.s32.totalorder %s163, %s164
      %p175 = scmp.eq.s32.totalorder %s25, 0
      %p176 = por %p174, %p175
      %p177 = scmp.ne.s32.totalorder %s163, %s164
      %p178 = scmp.eq.s32.totalorder %s26, 1
      %p179 = por %p177, %p178
      %p181 = scmp.ne.s32.totalorder %s164, %s180
      %p182 = scmp.eq.s32.totalorder %s26, 0
      %p183 = por %p181, %p182
      %s184 = ssub.s32 %s20, %s27
      %p185 = scmp.eq.s32.totalorder %s184, 0
      %s187 = sadd.s32 %s186, 1
      %s188 = scalar_select %p185, %s186, %s187
      %p191 = pneg %p185
      %p192 = scmp.eq.s32.totalorder %s20, 1
      %p193 = por %p191, %p192
      %p194 = scmp.ne.s32.totalorder %s186, %s189
      %p195 = scmp.eq.s32.totalorder %s20, 0
      %p196 = por %p194, %p195
      %p197 = scmp.ne.s32.totalorder %s186, %s189
      %p198 = scmp.eq.s32.totalorder %s25, 1
      %p199 = por %p197, %p198
      %p200 = scmp.ne.s32.totalorder %s189, %s190
      %p201 = scmp.eq.s32.totalorder %s25, 0
      %p202 = por %p200, %p201
      %p203 = scmp.ne.s32.totalorder %s189, %s190
      %p204 = scmp.eq.s32.totalorder %s26, 1
      %p205 = por %p203, %p204
      %p207 = scmp.ne.s32.totalorder %s190, %s206
      %p208 = scmp.eq.s32.totalorder %s26, 0
      %p209 = por %p207, %p208
      %s210 = ssub.s32 %s20, %s27
      %p211 = scmp.eq.s32.totalorder %s210, 0
      %s213 = sadd.s32 %s212, 1
      %s214 = scalar_select %p211, %s212, %s213
      %p217 = pneg %p211
      %p218 = scmp.eq.s32.totalorder %s20, 1
      %p219 = por %p217, %p218
      %p220 = scmp.ne.s32.totalorder %s212, %s215
      %p221 = scmp.eq.s32.totalorder %s20, 0
      %p222 = por %p220, %p221
      %p223 = scmp.ne.s32.totalorder %s212, %s215
      %p224 = scmp.eq.s32.totalorder %s25, 1
      %p225 = por %p223, %p224
      %p226 = scmp.ne.s32.totalorder %s215, %s216
      %p227 = scmp.eq.s32.totalorder %s25, 0
      %p228 = por %p226, %p227
      %p229 = scmp.ne.s32.totalorder %s215, %s216
      %p230 = scmp.eq.s32.totalorder %s26, 1
      %p231 = por %p229, %p230
      %p233 = scmp.ne.s32.totalorder %s216, %s232
      %p234 = scmp.eq.s32.totalorder %s26, 0
      %p235 = por %p233, %p234
      %p236 = scmp.le.s32.totalorder 1, %s20
      %p237 = scmp.lt.s32.totalorder %s20, 3
      %p238 = pnand %p236, %p237
      %p239 = pneg %p238
      // Predicated region
      $region9: #{gp_stream_forward.3} parent=5 // pred_check
        _
      $region10: #{gp_stream_forward.3} parent=5 // pred_check_branch
        %241 = sbr.rel (%p238) target = $region12
      $region11: #{gp_stream_forward.3} parent=5 // pred_region
        %s242 = ssub.s32 %s20, 1
      $region12: #{gp_stream_forward.3} parent=5 // pred_fallthru
        _
      %p243 = scmp.lt.s32.totalorder %s20, 2
      // Predicated region
      $region13: #{gp_stream_forward.3} parent=5 // pred_check
        %p244 = pneg %p243
      $region14: #{gp_stream_forward.3} parent=5 // pred_check_branch
        %246 = sbr.rel (%p244) target = $region16
      $region15: #{gp_stream_forward.3} parent=5 // pred_region
        // Predicated region
        $region17: #{gp_stream_forward.3} parent=15 // pred_check
          %p247 = pneg %p40
        $region18: #{gp_stream_forward.3} parent=15 // pred_check_branch
          %249 = sbr.rel (%p247) target = $region20
        $region19: #{gp_stream_forward.3} parent=15 // pred_region
          %p250 = scmp.lt.s32.totalorder %s20, 1
          %s251 = scalar_select %p250, %s20, 1
          %s252 = scalar_lea.vmem %s0, %s251
        $region20: #{gp_stream_forward.3} parent=15 // pred_fallthru
          _
        // Predicated region
        $region21: #{gp_stream_forward.3} parent=15 // pred_check
          %p253 = pneg %p66
        $region22: #{gp_stream_forward.3} parent=15 // pred_check_branch
          %255 = sbr.rel (%p253) target = $region24
        $region23: #{gp_stream_forward.3} parent=15 // pred_region
          %p256 = scmp.lt.s32.totalorder %s20, 1
          %s257 = scalar_select %p256, %s20, 1
          %s258 = smul.addr %s257, 8
          %s259 = scalar_lea.vmem %s1, %s258
        $region24: #{gp_stream_forward.3} parent=15 // pred_fallthru
          _
        // Predicated region
        $region25: #{gp_stream_forward.3} parent=15 // pred_check
          %p260 = pneg %p92
        $region26: #{gp_stream_forward.3} parent=15 // pred_check_branch
          %262 = sbr.rel (%p260) target = $region28
        $region27: #{gp_stream_forward.3} parent=15 // pred_region
          %p263 = scmp.lt.s32.totalorder %s20, 1
          %s264 = scalar_select %p263, %s20, 1
          %s265 = smul.addr %s264, 2
          %s266 = scalar_lea.vmem %s2, %s265
        $region28: #{gp_stream_forward.3} parent=15 // pred_fallthru
          _
        // Predicated region
        $region29: #{gp_stream_forward.3} parent=15 // pred_check
          %p267 = pneg %p118
        $region30: #{gp_stream_forward.3} parent=15 // pred_check_branch
          %269 = sbr.rel (%p267) target = $region32
        $region31: #{gp_stream_forward.3} parent=15 // pred_region
          %p270 = scmp.lt.s32.totalorder %s20, 1
          %s271 = scalar_select %p270, %s20, 1
          %s272 = smul.addr %s271, 2
          %s273 = scalar_lea.vmem %s3, %s272
        $region32: #{gp_stream_forward.3} parent=15 // pred_fallthru
          _
        // Predicated region
        $region33: #{gp_stream_forward.3} parent=15 // pred_check
          %p274 = pneg %p144
        $region34: #{gp_stream_forward.3} parent=15 // pred_check_branch
          %276 = sbr.rel (%p274) target = $region36
        $region35: #{gp_stream_forward.3} parent=15 // pred_region
          %p277 = scmp.lt.s32.totalorder %s20, 1
          %s278 = scalar_select %p277, %s20, 1
          %s279 = smul.addr %s278, 8
          %s280 = scalar_lea.vmem %s4, %s279
        $region36: #{gp_stream_forward.3} parent=15 // pred_fallthru
          _
        // Predicated region
        $region37: #{gp_stream_forward.3} parent=15 // pred_check
          %p281 = pneg %p170
        $region38: #{gp_stream_forward.3} parent=15 // pred_check_branch
          %283 = sbr.rel (%p281) target = $region40
        $region39: #{gp_stream_forward.3} parent=15 // pred_region
          %p284 = scmp.lt.s32.totalorder %s20, 1
          %s285 = scalar_select %p284, %s20, 1
          %s286 = scalar_lea.vmem %s5, %s285
        $region40: #{gp_stream_forward.3} parent=15 // pred_fallthru
          _
      $region16: #{gp_stream_forward.3} parent=5 // pred_fallthru
        _
      %p287 = scmp.le.s32.totalorder 1, %s20
      %p288 = scmp.lt.s32.totalorder %s20, 3
      %p289 = pnand %p287, %p288
      %p290 = pneg %p289
      // Predicated region
      $region41: #{gp_stream_forward.3} parent=5 // pred_check
        _
      $region42: #{gp_stream_forward.3} parent=5 // pred_check_branch
        %292 = sbr.rel (%p289) target = $region44
      $region43: #{gp_stream_forward.3} parent=5 // pred_region
        %s293 = ssub.s32 %s20, 1
        %p294 = scmp.lt.s32.totalorder %s25, 1
        %s295 = scalar_select %p294, %s25, 1
        %s296 = scalar_lea.vmem %s0, %s295
        %p297 = pneg %p46
        %p298 = pneg %p43
        %p299 = scmp.lt.s32.totalorder %s25, 1
        %s300 = scalar_select %p299, %s25, 1
        %s301 = smul.addr %s300, 8
        %s302 = scalar_lea.vmem %s1, %s301
        %p303 = pneg %p72
        %p304 = pneg %p69
        %p305 = scmp.lt.s32.totalorder %s25, 1
        %s306 = scalar_select %p305, %s25, 1
        %s307 = smul.addr %s306, 2
        %s308 = scalar_lea.vmem %s2, %s307
        %p309 = pneg %p98
        %p310 = pneg %p95
        %p311 = scmp.lt.s32.totalorder %s25, 1
        %s312 = scalar_select %p311, %s25, 1
        %s313 = smul.addr %s312, 2
        %s314 = scalar_lea.vmem %s3, %s313
        %p315 = pneg %p124
        %p316 = pneg %p121
        %p317 = scmp.lt.s32.totalorder %s25, 1
        %s318 = scalar_select %p317, %s25, 1
        %s319 = smul.addr %s318, 8
        %s320 = scalar_lea.vmem %s4, %s319
        %p321 = pneg %p150
        %p322 = pneg %p147
        %p323 = scmp.lt.s32.totalorder %s25, 1
        %s324 = scalar_select %p323, %s25, 1
        %s325 = scalar_lea.vmem %s5, %s324
        %p326 = pneg %p176
        %p327 = pneg %p173
        %p328 = pneg %p202
        %p329 = pneg %p199
        %s330 = sand.u32 %s189, 1
        %s331 = scalar_lea.sflag [#allocation3], %s330
        %s332 = sand.u32 %s189, 1
        %s333 = scalar_lea.vmem [#allocation2], %s332
        %p334 = pneg %p228
        %p335 = pneg %p225
        %s336 = sand.u32 %s215, 1
        %s337 = scalar_lea.sflag [#allocation5], %s336
        %s338 = sand.u32 %s215, 1
        %s339 = smul.addr %s338, 8
        %s340 = scalar_lea.vmem [#allocation4], %s339
        %p341 = scmp.lt.s32.totalorder %s25, 1
        %s342 = scalar_select %p341, %s25, 1
        %s343 = scalar_lea.vmem %s0, %s342
        %p344 = scmp.lt.s32.totalorder %s25, 1
        %s345 = scalar_select %p344, %s25, 1
        %s346 = smul.addr %s345, 8
        %s347 = scalar_lea.vmem %s1, %s346
        %p348 = scmp.lt.s32.totalorder %s25, 1
        %s349 = scalar_select %p348, %s25, 1
        %s350 = smul.addr %s349, 2
        %s351 = scalar_lea.vmem %s2, %s350
        %p352 = scmp.lt.s32.totalorder %s25, 1
        %s353 = scalar_select %p352, %s25, 1
        %s354 = smul.addr %s353, 2
        %s355 = scalar_lea.vmem %s3, %s354
        %p356 = scmp.lt.s32.totalorder %s25, 1
        %s357 = scalar_select %p356, %s25, 1
        %s358 = smul.addr %s357, 8
        %s359 = scalar_lea.vmem %s4, %s358
        %p360 = scmp.lt.s32.totalorder %s25, 1
        %s361 = scalar_select %p360, %s25, 1
        %s362 = scalar_lea.vmem %s5, %s361
        %v363 = vld [vmem:[%s343] sm:$0x1]
        %v364 = vmul.f32 %v363, %v363
        %v365 = vrcp.pop %v364
        %v366 = vmul.f32 -0.5, %v365
        %v367 = vld [vmem:[%s347] sm:$0xff]
        %v368 = vld [vmem:[%s355] sm:$0x3]
        %370 = vset.pattern.permute.xlu0 0
        %371 = vperm.xlu0 %370, %v367
        %v372 = vpop.permute.xlu0 %371
        %v374 = vlaneseq
        %v375 = vshrl.u32 %v374, 7
        %v376 = vsub.s32 0, %v375
        %v377 = vrot.slane %v368, %v376
        %v378 = vsub.f32 %v372, %v377
        %v379 = vmul.f32 %v378, %v378
        %380 = vset.pattern.permute.xlu0 1
        %381 = vperm.xlu0 %380, %v367
        %v382 = vpop.permute.xlu0 %381
        %v384 = vlaneseq
        %v385 = vshrl.u32 %v384, 7
        %v386 = vsub.s32 1, %v385
        %v387 = vrot.slane %v368, %v386
        %v388 = vsub.f32 %v382, %v387
        %v389 = vmul.f32 %v388, %v388
        %v390 = vadd.f32 %v379, %v389
        %v392 = vlaneseq
        %v393 = vshrl.u32 %v392, 7
        %v394 = vsub.s32 0, %v393
        %v395 = vrot.slane %v366, %v394
        %396 = vset.pattern.permute.xlu0 0
        %397 = vperm.xlu0 %396, %v395
        %v398 = vpop.permute.xlu0 %397
        %v400 = vmul.f32 %v390, %v398
        %v401 = vmul.f32 %v400, 1.442695
        %v402 = vpow.pop %v401
        %v404 = vlaneseq
        %v405 = vshrl.u32 %v404, 7
        %v406 = vsub.s32 0, %v405
        %v407 = vrot.slane %v363, %v406
        %408 = vset.pattern.permute.xlu0 1
        %409 = vperm.xlu0 %408, %v407
        %v410 = vpop.permute.xlu0 %409
        %v412 = vmul.f32 %v410, %v402
        %v413 = vld [vmem:[%s359] sm:$0xff]
        %vm414 = vcmask 64512
        %v416 = vsel %vm414, %v412, 0
        %418 = vmatprep.subr.mxu0 0.0
        %419 = vmatpush1.msra.mxu0 %v413
        %420 = vmatprep.subr.mxu0 0.0
        %421 = vmatpush1.msra.mxu0 0.0
        %422 = vmatprep.subr.mxu0 0.0
        %423 = vmatpush1.msra.mxu0 0.0
        %424 = vmatprep.subr.mxu0 0.0
        %425 = vmatpush1.msra.mxu0 0.0
        %426 = vmatprep.subr.mxu0 0.0
        %427 = vmatpush1.msra.mxu0 0.0
        %428 = vmatprep.subr.mxu0 0.0
        %429 = vmatpush1.msra.mxu0 0.0
        %430 = vmatprep.subr.mxu0 0.0
        %431 = vmatpush1.msra.mxu0 0.0
        %432 = vmatprep.subr.mxu0 0.0
        %433 = vmatpush1.msra.mxu0 0.0
        %434 = vmatprep.subr.mxu0 0.0
        %435 = vmatpush1.msra.mxu0 0.0
        %436 = vmatprep.subr.mxu0 0.0
        %437 = vmatpush1.msra.mxu0 0.0
        %438 = vmatprep.subr.mxu0 0.0
        %439 = vmatpush1.msra.mxu0 0.0
        %440 = vmatprep.subr.mxu0 0.0
        %441 = vmatpush1.msra.mxu0 0.0
        %442 = vmatprep.subr.mxu0 0.0
        %443 = vmatpush1.msra.mxu0 0.0
        %444 = vmatprep.subr.mxu0 0.0
        %445 = vmatpush1.msra.mxu0 0.0
        %446 = vmatprep.subr.mxu0 0.0
        %447 = vmatpush1.msra.mxu0 0.0
        %448 = vmatprep.subr.mxu0 0.0
        %449 = vmatpush1.msra.mxu0 0.0
        %450 = vmatprep.subr.mxu0 0.0
        %451 = vmatpush1.msra.mxu0 0.0
        %452 = vmatprep.subr.mxu0 0.0
        %453 = vmatpush1.msra.mxu0 0.0
        %454 = vmatprep.subr.mxu0 0.0
        %455 = vmatpush1.msra.mxu0 0.0
        %456 = vmatprep.subr.mxu0 0.0
        %457 = vmatpush1.msra.mxu0 0.0
        %458 = vmatprep.subr.mxu0 0.0
        %459 = vmatpush1.msra.mxu0 0.0
        %460 = vmatprep.subr.mxu0 0.0
        %461 = vmatpush1.msra.mxu0 0.0
        %462 = vmatprep.subr.mxu0 0.0
        %463 = vmatpush1.msra.mxu0 0.0
        %464 = vmatprep.subr.mxu0 0.0
        %465 = vmatpush1.msra.mxu0 0.0
        %466 = vmatprep.subr.mxu0 0.0
        %467 = vmatpush1.msra.mxu0 0.0
        %468 = vmatprep.subr.mxu0 0.0
        %469 = vmatpush1.msra.mxu0 0.0
        %470 = vmatprep.subr.mxu0 0.0
        %471 = vmatpush1.msra.mxu0 0.0
        %472 = vmatprep.subr.mxu0 0.0
        %473 = vmatpush1.msra.mxu0 0.0
        %474 = vmatprep.subr.mxu0 0.0
        %475 = vmatpush1.msra.mxu0 0.0
        %476 = vmatprep.subr.mxu0 0.0
        %477 = vmatpush1.msra.mxu0 0.0
        %478 = vmatprep.subr.mxu0 0.0
        %479 = vmatpush1.msra.mxu0 0.0
        %480 = vmatprep.subr.mxu0 0.0
        %481 = vmatpush1.msra.mxu0 0.0
        %482 = vmatprep.mubr.f32.mxu0 0.0
        %483 = vmatmul.mubr.f32.gmra.mrb[0].mxu0 %v416
        %v484 = vpop.f32.mrb[0].mxu0
        %v485 = vadd.f32 0.0, %v484
        %v486 = vpop.f32.mrb[0].mxu0
        %487 = vdwg.mxu0
        %v488 = vld [vmem:[%s362] sm:$0x1]
        %489 = vset.pattern.permute.xlu0 3
        %490 = vperm.xlu0 %489, %v363
        %v491 = vpop.permute.xlu0 %490
        %v493 = vlaneseq
        %v494 = vshrl.u32 %v493, 7
        %v495 = vsub.s32 0, %v494
        %v496 = vrot.slane %v491, %v495
        %v497 = vsub.f32 %v488, %v496
        %v499 = vsel %vm414, %v497, 0
        %v502 = vsel %vm414, %v485, 0
        %504 = vmatprep.subr.mxu0 0.0
        %505 = vmatpush1.xpose.msra.mxu0 %v502
        %506 = vmatprep.subr.mxu0 0.0
        %507 = vmatpush1.xpose.msra.mxu0 0.0
        %508 = vmatprep.subr.mxu0 0.0
        %509 = vmatpush1.xpose.msra.mxu0 0.0
        %510 = vmatprep.subr.mxu0 0.0
        %511 = vmatpush1.xpose.msra.mxu0 0.0
        %512 = vmatprep.subr.mxu0 0.0
        %513 = vmatpush1.xpose.msra.mxu0 0.0
        %514 = vmatprep.subr.mxu0 0.0
        %515 = vmatpush1.xpose.msra.mxu0 0.0
        %516 = vmatprep.subr.mxu0 0.0
        %517 = vmatpush1.xpose.msra.mxu0 0.0
        %518 = vmatprep.subr.mxu0 0.0
        %519 = vmatpush1.xpose.msra.mxu0 0.0
        %520 = vmatprep.subr.mxu0 0.0
        %521 = vmatpush1.xpose.msra.mxu0 0.0
        %522 = vmatprep.subr.mxu0 0.0
        %523 = vmatpush1.xpose.msra.mxu0 0.0
        %524 = vmatprep.subr.mxu0 0.0
        %525 = vmatpush1.xpose.msra.mxu0 0.0
        %526 = vmatprep.subr.mxu0 0.0
        %527 = vmatpush1.xpose.msra.mxu0 0.0
        %528 = vmatprep.subr.mxu0 0.0
        %529 = vmatpush1.xpose.msra.mxu0 0.0
        %530 = vmatprep.subr.mxu0 0.0
        %531 = vmatpush1.xpose.msra.mxu0 0.0
        %532 = vmatprep.subr.mxu0 0.0
        %533 = vmatpush1.xpose.msra.mxu0 0.0
        %534 = vmatprep.subr.mxu0 0.0
        %535 = vmatpush1.xpose.msra.mxu0 0.0
        %536 = vmatprep.subr.mxu0 0.0
        %537 = vmatpush1.xpose.msra.mxu0 0.0
        %538 = vmatprep.subr.mxu0 0.0
        %539 = vmatpush1.xpose.msra.mxu0 0.0
        %540 = vmatprep.subr.mxu0 0.0
        %541 = vmatpush1.xpose.msra.mxu0 0.0
        %542 = vmatprep.subr.mxu0 0.0
        %543 = vmatpush1.xpose.msra.mxu0 0.0
        %544 = vmatprep.subr.mxu0 0.0
        %545 = vmatpush1.xpose.msra.mxu0 0.0
        %546 = vmatprep.subr.mxu0 0.0
        %547 = vmatpush1.xpose.msra.mxu0 0.0
        %548 = vmatprep.subr.mxu0 0.0
        %549 = vmatpush1.xpose.msra.mxu0 0.0
        %550 = vmatprep.subr.mxu0 0.0
        %551 = vmatpush1.xpose.msra.mxu0 0.0
        %552 = vmatprep.subr.mxu0 0.0
        %553 = vmatpush1.xpose.msra.mxu0 0.0
        %554 = vmatprep.subr.mxu0 0.0
        %555 = vmatpush1.xpose.msra.mxu0 0.0
        %556 = vmatprep.subr.mxu0 0.0
        %557 = vmatpush1.xpose.msra.mxu0 0.0
        %558 = vmatprep.subr.mxu0 0.0
        %559 = vmatpush1.xpose.msra.mxu0 0.0
        %560 = vmatprep.subr.mxu0 0.0
        %561 = vmatpush1.xpose.msra.mxu0 0.0
        %562 = vmatprep.subr.mxu0 0.0
        %563 = vmatpush1.xpose.msra.mxu0 0.0
        %564 = vmatprep.subr.mxu0 0.0
        %565 = vmatpush1.xpose.msra.mxu0 0.0
        %566 = vmatprep.subr.mxu0 0.0
        %567 = vmatpush1.xpose.msra.mxu0 0.0
        %568 = vmatprep.mubr.f32.mxu0 0.0
        %569 = vmatmul.mubr.f32.gmra.mrb[0].mxu0 %v499
        %v570 = vpop.f32.mrb[0].mxu0
        %v571 = vadd.f32 0.0, %v570
        %v572 = vpop.f32.mrb[0].mxu0
        %573 = vdwg.mxu0
        %v574 = vadd.f32 %v496, %v571
        %vm575 = vcmask 57344
        %576 = vst.msk [vmem:[%s333] sm:$0x1] %vm575, %v574
        %577 = vmatprep.subr.mxu0 0.0
        %578 = vmatpush1.xpose.msra.mxu0 %v416
        %579 = vmatprep.subr.mxu0 0.0
        %580 = vmatpush1.xpose.msra.mxu0 0.0
        %581 = vmatprep.subr.mxu0 0.0
        %582 = vmatpush1.xpose.msra.mxu0 0.0
        %583 = vmatprep.subr.mxu0 0.0
        %584 = vmatpush1.xpose.msra.mxu0 0.0
        %585 = vmatprep.subr.mxu0 0.0
        %586 = vmatpush1.xpose.msra.mxu0 0.0
        %587 = vmatprep.subr.mxu0 0.0
        %588 = vmatpush1.xpose.msra.mxu0 0.0
        %589 = vmatprep.subr.mxu0 0.0
        %590 = vmatpush1.xpose.msra.mxu0 0.0
        %591 = vmatprep.subr.mxu0 0.0
        %592 = vmatpush1.xpose.msra.mxu0 0.0
        %593 = vmatprep.subr.mxu0 0.0
        %594 = vmatpush1.xpose.msra.mxu0 0.0
        %595 = vmatprep.subr.mxu0 0.0
        %596 = vmatpush1.xpose.msra.mxu0 0.0
        %597 = vmatprep.subr.mxu0 0.0
        %598 = vmatpush1.xpose.msra.mxu0 0.0
        %599 = vmatprep.subr.mxu0 0.0
        %600 = vmatpush1.xpose.msra.mxu0 0.0
        %601 = vmatprep.subr.mxu0 0.0
        %602 = vmatpush1.xpose.msra.mxu0 0.0
        %603 = vmatprep.subr.mxu0 0.0
        %604 = vmatpush1.xpose.msra.mxu0 0.0
        %605 = vmatprep.subr.mxu0 0.0
        %606 = vmatpush1.xpose.msra.mxu0 0.0
        %607 = vmatprep.subr.mxu0 0.0
        %608 = vmatpush1.xpose.msra.mxu0 0.0
        %609 = vmatprep.subr.mxu0 0.0
        %610 = vmatpush1.xpose.msra.mxu0 0.0
        %611 = vmatprep.subr.mxu0 0.0
        %612 = vmatpush1.xpose.msra.mxu0 0.0
        %613 = vmatprep.subr.mxu0 0.0
        %614 = vmatpush1.xpose.msra.mxu0 0.0
        %615 = vmatprep.subr.mxu0 0.0
        %616 = vmatpush1.xpose.msra.mxu0 0.0
        %617 = vmatprep.subr.mxu0 0.0
        %618 = vmatpush1.xpose.msra.mxu0 0.0
        %619 = vmatprep.subr.mxu0 0.0
        %620 = vmatpush1.xpose.msra.mxu0 0.0
        %621 = vmatprep.subr.mxu0 0.0
        %622 = vmatpush1.xpose.msra.mxu0 0.0
        %623 = vmatprep.subr.mxu0 0.0
        %624 = vmatpush1.xpose.msra.mxu0 0.0
        %625 = vmatprep.subr.mxu0 0.0
        %626 = vmatpush1.xpose.msra.mxu0 0.0
        %627 = vmatprep.subr.mxu0 0.0
        %628 = vmatpush1.xpose.msra.mxu0 0.0
        %629 = vmatprep.subr.mxu0 0.0
        %630 = vmatpush1.xpose.msra.mxu0 0.0
        %631 = vmatprep.subr.mxu0 0.0
        %632 = vmatpush1.xpose.msra.mxu0 0.0
        %633 = vmatprep.subr.mxu0 0.0
        %634 = vmatpush1.xpose.msra.mxu0 0.0
        %635 = vmatprep.subr.mxu0 0.0
        %636 = vmatpush1.xpose.msra.mxu0 0.0
        %637 = vmatprep.subr.mxu0 0.0
        %638 = vmatpush1.xpose.msra.mxu0 0.0
        %639 = vmatprep.subr.mxu0 0.0
        %640 = vmatpush1.xpose.msra.mxu0 0.0
        %641 = vmatprep.mubr.f32.mxu0 0.0
        %642 = vmatmul.mubr.f32.gmra.mrb[0].mxu0 %v502
        %v643 = vpop.f32.mrb[0].mxu0
        %v644 = vadd.f32 0.0, %v643
        %v645 = vpop.f32.mrb[0].mxu0
        %646 = vdwg.mxu0
        %v647 = vld [vmem:[%s351] sm:$0x3]
        %v648 = vlaneseq
        %v649 = vshrl.u32 %v648, 7
        %v650 = vsub.s32 0, %v649
        %v651 = vrot.slane %v647, %v650
        %v652 = vsub.f32 %v372, %v651
        %v653 = vmul.f32 %v652, %v652
        %v654 = vlaneseq
        %v655 = vshrl.u32 %v654, 7
        %v656 = vsub.s32 1, %v655
        %v657 = vrot.slane %v647, %v656
        %v658 = vsub.f32 %v382, %v657
        %v659 = vmul.f32 %v658, %v658
        %v660 = vadd.f32 %v653, %v659
        %v661 = vmul.f32 %v660, %v398
        %v662 = vmul.f32 %v661, 1.442695
        %v663 = vpow.pop %v662
        %v664 = vmul.f32 %v410, %v663
        %v665 = vlaneseq
        %v666 = vshrl.u32 %v665, 7
        %v667 = vlaneseq
        %v668 = vand.u32 %v667, 127
        %vm669 = vcmp.eq.s32.totalorder %v666, %v668
        %670 = vset.pattern.permute.xlu0 2
        %671 = vperm.xlu0 %670, %v407
        %v672 = vpop.permute.xlu0 %671
        %v674 = vadd.f32 %v664, %v672
        %v675 = vsel %vm669, %v674, %v664
        %v676 = vsub.f32 %v675, %v644
        %677 = vst.msk [vmem:[%s340] sm:$0xff] %vm414, %v676
        %s678 = sand.u32 %s189, 1
        %s679 = scalar_lea.sflag [#allocation3], %s678
        %s680 = sand.u32 %s189, 1
        %s681 = scalar_lea.vmem [#allocation2], %s680
        %s682 = sand.u32 %s215, 1
        %s683 = scalar_lea.sflag [#allocation5], %s682
        %s684 = sand.u32 %s215, 1
        %s685 = smul.addr %s684, 8
        %s686 = scalar_lea.vmem [#allocation4], %s685
        // Predicated region
        $region45: #{gp_stream_forward.3} parent=43 // pred_check
          %p687 = pneg %p199
        $region46: #{gp_stream_forward.3} parent=43 // pred_check_branch
          %689 = sbr.rel (%p687) target = $region48
        $region47: #{gp_stream_forward.3} parent=43 // pred_region
          %s691 = ssub.s32 16, 16
          %692 = vsyncadd %s679, %s691
          %s693 = smul.addr %s25, 16
          %s694 = scalar_lea.hbm %s6, %s693
          %s696 = sshll.u32 %s681, 4
          %s697 = int_to_ptr.vmem [resolvable:$true] %s696
          %699 = dma.vmem_to_hbm [thread:$0]  %s697, 16, %s694, %s679
        $region48: #{gp_stream_forward.3} parent=43 // pred_fallthru
          _
        // Predicated region
        $region49: #{gp_stream_forward.3} parent=43 // pred_check
          %p700 = pneg %p225
        $region50: #{gp_stream_forward.3} parent=43 // pred_check_branch
          %702 = sbr.rel (%p700) target = $region52
        $region51: #{gp_stream_forward.3} parent=43 // pred_region
          %s704 = ssub.s32 128, 128
          %705 = vsyncadd %s683, %s704
          %s706 = smul.addr %s25, 128
          %s707 = scalar_lea.hbm %s7, %s706
          %s709 = sshll.u32 %s686, 4
          %s710 = int_to_ptr.vmem [resolvable:$true] %s709
          %712 = dma.vmem_to_hbm [thread:$0]  %s710, 128, %s707, %s683
        $region52: #{gp_stream_forward.3} parent=43 // pred_fallthru
          _
      $region44: #{gp_stream_forward.3} parent=5 // pred_fallthru
        _
      %p713 = scmp.le.s32.totalorder 2, %s20
      // Predicated region
      $region53: #{gp_stream_forward.3} parent=5 // pred_check
        %p714 = pneg %p713
      $region54: #{gp_stream_forward.3} parent=5 // pred_check_branch
        %716 = sbr.rel (%p714) target = $region56
      $region55: #{gp_stream_forward.3} parent=5 // pred_region
        %s717 = ssub.s32 %s20, 2
        // Predicated region
        $region57: #{gp_stream_forward.3} parent=55 // pred_check
          %p718 = pneg %p205
        $region58: #{gp_stream_forward.3} parent=55 // pred_check_branch
          %720 = sbr.rel (%p718) target = $region60
        $region59: #{gp_stream_forward.3} parent=55 // pred_region
          %s721 = sand.u32 %s190, 1
          %s722 = scalar_lea.sflag [#allocation3], %s721
          %s723 = sand.u32 %s190, 1
          %s724 = scalar_lea.vmem [#allocation2], %s723
          %725 = dma.done %s722, 16
        $region60: #{gp_stream_forward.3} parent=55 // pred_fallthru
          _
        // Predicated region
        $region61: #{gp_stream_forward.3} parent=55 // pred_check
          %p726 = pneg %p231
        $region62: #{gp_stream_forward.3} parent=55 // pred_check_branch
          %728 = sbr.rel (%p726) target = $region64
        $region63: #{gp_stream_forward.3} parent=55 // pred_region
          %s729 = sand.u32 %s216, 1
          %s730 = scalar_lea.sflag [#allocation5], %s729
          %s731 = sand.u32 %s216, 1
          %s732 = smul.addr %s731, 8
          %s733 = scalar_lea.vmem [#allocation4], %s732
          %734 = dma.done %s730, 128
        $region64: #{gp_stream_forward.3} parent=55 // pred_fallthru
          _
      $region56: #{gp_stream_forward.3} parent=5 // pred_fallthru
        _
    $region6: #{gp_stream_forward.3} parent=1 // loop_footer
      %s24 = sadd.s32 1, %s20
    $region7: #{gp_stream_forward.3} parent=1 // loop_footer_branch
      %19 = sbr.rel target = $region3
    $region8: #{gp_stream_forward.3} parent=1 // loop_exit
      _
    %735 = vsyncpa [#allocation3], 1
    %s736 = scalar_lea.sflag [#allocation3], 1
    %737 = vsyncpa %s736, 1
    %738 = vsyncpa [#allocation5], 1
    %s739 = scalar_lea.sflag [#allocation5], 1
    %740 = vsyncpa %s739, 1

</llo_original>
